<compile_context>
chip_gen: v6e
topology: v6e:2x2x1
jax: 0.10.0
libtpu: 0.0.40
codegen_flags: <defaults>
</compile_context>

<pallas_src>
import jax
import jax.numpy as jnp
from jax.experimental import pallas as pl
from jax.experimental.pallas import tpu as pltpu

D_IN = 520
D_IN_PAD = 640      # 5 * 128 lanes
D_H1 = 256
D_H2 = 128
D_BOT = 64
D_BOT_PAD = 128

# padded (in, out) dims for the six layers
_PADDED_DIMS = [(D_IN_PAD, D_H1), (D_H1, D_H2), (D_H2, D_BOT_PAD),
                (D_BOT_PAD, D_H2), (D_H2, D_H1), (D_H1, D_IN_PAD)]
_UNPADDED_DIMS = [(D_IN, D_H1), (D_H1, D_H2), (D_H2, D_BOT),
                  (D_BOT, D_H2), (D_H2, D_H1), (D_H1, D_IN)]


def _round_up(x, m):
    return ((x + m - 1) // m) * m


# -------------------------- Pallas kernel (hot path) --------------------------
def autoencoder_kernel(x_ref,
                       w1, b1, w2, b2, w3, b3,      # encoder params (bf16 W, f32 b)
                       w4, b4, w5, b5, w6, b6,      # decoder params
                       enc_ref, dec_ref):
    x = x_ref[...]                                   # bf16 (tile_b, 640)

    def dense(h_bf16, w_ref, b_ref):
        # bf16 x bf16 -> f32 accumulate on the MXU, bias add in f32
        acc = jnp.dot(h_bf16, w_ref[...], preferred_element_type=jnp.float32)
        return acc + b_ref[...]

    # ----- encoder -----
    h = jnp.tanh(dense(x, w1, b1)).astype(jnp.bfloat16)
    h = jnp.tanh(dense(h, w2, b2)).astype(jnp.bfloat16)
    enc = dense(h, w3, b3)                           # f32 (tile_b, 128)
    enc_ref[...] = enc.astype(enc_ref.dtype)

    # ----- decoder -----
    d = jnp.tanh(dense(enc.astype(jnp.bfloat16), w4, b4)).astype(jnp.bfloat16)
    d = jnp.tanh(dense(d, w5, b5)).astype(jnp.bfloat16)
    dec = dense(d, w6, b6)                           # f32 (tile_b, 640)
    dec_ref[...] = dec.astype(dec_ref.dtype)


# --------------------------- host-side param padding ---------------------------
def pad_params(params):
    """Zero-pad weights/biases to lane-aligned shapes; weights cast to bf16."""
    padded = []
    for (w, b), (r, c) in zip(params, _PADDED_DIMS):
        wp = jnp.zeros((r, c), jnp.bfloat16).at[:w.shape[0], :w.shape[1]].set(
            w.astype(jnp.bfloat16))
        bp = jnp.zeros((1, c), jnp.float32).at[:, :b.shape[1]].set(
            b.astype(jnp.float32))
        padded.append((wp, bp))
    return padded


# ------------------------------- JAX wrapper ----------------------------------
def autoencoder_forward(x, params, *, tile_b=512):
    B, d_in = x.shape
    assert d_in == D_IN

    # Batch tile: multiple of 8 rows, no larger than (rounded-up) batch.
    tile_b = min(_round_up(tile_b, 8), _round_up(max(B, 8), 8))
    Bp = _round_up(B, tile_b)
    n_steps = Bp // tile_b

    # Pad + cast the input once on the host side (lane-dense bf16).
    xp = jnp.zeros((Bp, D_IN_PAD), jnp.bfloat16)
    xp = xp.at[:B, :D_IN].set(x.astype(jnp.bfloat16))

    padded_params = pad_params(params)
    flat_params = []
    for w, b in padded_params:
        flat_params += [w, b]

    def full_spec(shape):
        # whole parameter resident in VMEM, identical block every grid step
        return pl.BlockSpec(shape, lambda i: (0, 0))

    in_specs = [pl.BlockSpec((tile_b, D_IN_PAD), lambda i: (i, 0))]
    for w, b in padded_params:
        in_specs.append(full_spec(w.shape))
        in_specs.append(full_spec(b.shape))

    out_specs = [
        pl.BlockSpec((tile_b, D_BOT_PAD), lambda i: (i, 0)),
        pl.BlockSpec((tile_b, D_IN_PAD), lambda i: (i, 0)),
    ]
    out_shape = (
        jax.ShapeDtypeStruct((Bp, D_BOT_PAD), jnp.float32),
        jax.ShapeDtypeStruct((Bp, D_IN_PAD), jnp.float32),
    )

    layer_macs = sum(r * c for r, c in _PADDED_DIMS)
    weight_bytes = sum(w.size * 2 + b.size * 4 for w, b in padded_params)
    cost = pl.CostEstimate(
        flops=2 * Bp * layer_macs,
        transcendentals=Bp * (D_H1 + D_H2 + D_H2 + D_H1),
        bytes_accessed=Bp * D_IN_PAD * 2                     # x (bf16)
        + Bp * (D_BOT_PAD + D_IN_PAD) * 4                    # enc + dec (f32)
        + n_steps * weight_bytes,
    )

    enc_p, dec_p = pl.pallas_call(
        autoencoder_kernel,
        out_shape=out_shape,
        grid_spec=pltpu.PrefetchScalarGridSpec(
            num_scalar_prefetch=0,
            grid=(n_steps,),
            in_specs=in_specs,
            out_specs=out_specs,
        ),
        compiler_params=pltpu.CompilerParams(
            dimension_semantics=("parallel",),
            vmem_limit_bytes=48 * 1024 * 1024,
        ),
        cost_estimate=cost,
    )(xp, *flat_params)

    # Strip batch/feature padding.
    return enc_p[:B, :D_BOT], dec_p[:B, :D_IN]


# --------------------------- deterministic params -----------------------------
def init_linear(key, fan_in, fan_out):
    # mimic PyTorch nn.Linear default init: U(-1/sqrt(fan_in), 1/sqrt(fan_in))
    kw, kb = jax.random.split(key)
    bound = 1.0 / jnp.sqrt(jnp.float32(fan_in))
    w = jax.random.uniform(kw, (fan_in, fan_out), jnp.float32, -bound, bound)
    b = jax.random.uniform(kb, (1, fan_out), jnp.float32, -bound, bound)
    return w, b


def init_params(key):
    keys = jax.random.split(key, len(_UNPADDED_DIMS))
    return [init_linear(k, i, o) for k, (i, o) in zip(keys, _UNPADDED_DIMS)]


# ------------------------------ references ------------------------------------
def reference_forward_f32(x, params):
    (w1, b1), (w2, b2), (w3, b3), (w4, b4), (w5, b5), (w6, b6) = params
    h = jnp.tanh(x @ w1 + b1)
    h = jnp.tanh(h @ w2 + b2)
    enc = h @ w3 + b3
    d = jnp.tanh(enc @ w4 + b4)
    d = jnp.tanh(d @ w5 + b5)
    dec = d @ w6 + b6
    return enc, dec


def reference_forward_bf16(x, params):
    # mirrors the kernel's numerics: bf16 matmul inputs, f32 accumulation/tanh
    def dense(h, w, b):
        return jnp.dot(h.astype(jnp.bfloat16), w.astype(jnp.bfloat16),
                       preferred_element_type=jnp.float32) + b
    (w1, b1), (w2, b2), (w3, b3), (w4, b4), (w5, b5), (w6, b6) = params
    h = jnp.tanh(dense(x, w1, b1))
    h = jnp.tanh(dense(h, w2, b2))
    enc = dense(h, w3, b3)
    d = jnp.tanh(dense(enc, w4, b4))
    d = jnp.tanh(dense(d, w5, b5))
    dec = dense(d, w6, b6)
    return enc, dec


if __name__ == "__main__":
    key = jax.random.PRNGKey(0)
    kx, kp = jax.random.split(key)

    B = 8
    x = jax.random.normal(kx, (B, D_IN), jnp.float32)
    params = init_params(kp)

    enc, dec = autoencoder_forward(x, params)
    jax.block_until_ready((enc, dec))

    assert enc.shape == (B, D_BOT) and dec.shape == (B, D_IN)

    # Tight check against a numerics-matched (bf16-input matmul) reference.
    ref_enc_bf16, ref_dec_bf16 = reference_forward_bf16(x, params)
    assert jnp.allclose(enc, ref_enc_bf16, atol=5e-3, rtol=5e-3)
    assert jnp.allclose(dec, ref_dec_bf16, atol=5e-3, rtol=5e-3)

    # Loose sanity check against the full-f32 reference.
    ref_enc, ref_dec = reference_forward_f32(x, params)
    assert jnp.allclose(enc, ref_enc, atol=1e-1, rtol=1e-1)
    assert jnp.allclose(dec, ref_dec, atol=1e-1, rtol=1e-1)

    print("KERNEL_OK")
</pallas_src>

<mosaic_0001>
module attributes {stable_mosaic.version = 11 : i64} {
  func.func @autoencoder_kernel(%arg0: i32, %arg1: memref<8x640xbf16, #tpu.memory_space<vmem>>, %arg2: memref<640x256xbf16, #tpu.memory_space<vmem>>, %arg3: memref<1x256xf32, #tpu.memory_space<vmem>>, %arg4: memref<256x128xbf16, #tpu.memory_space<vmem>>, %arg5: memref<1x128xf32, #tpu.memory_space<vmem>>, %arg6: memref<128x128xbf16, #tpu.memory_space<vmem>>, %arg7: memref<1x128xf32, #tpu.memory_space<vmem>>, %arg8: memref<128x128xbf16, #tpu.memory_space<vmem>>, %arg9: memref<1x128xf32, #tpu.memory_space<vmem>>, %arg10: memref<128x256xbf16, #tpu.memory_space<vmem>>, %arg11: memref<1x256xf32, #tpu.memory_space<vmem>>, %arg12: memref<256x640xbf16, #tpu.memory_space<vmem>>, %arg13: memref<1x640xf32, #tpu.memory_space<vmem>>, %arg14: memref<8x128xf32, #tpu.memory_space<vmem>>, %arg15: memref<8x640xf32, #tpu.memory_space<vmem>>) attributes {dimension_semantics = [#tpu.dimension_semantics<parallel>], iteration_bounds = array<i64: 1>, scalar_prefetch = 0 : i64, scratch_operands = 0 : i64, tpu.core_type = #tpu.core_type<tc>, window_params = [{transform_indices = @transform_0, window_bounds = array<i64: 8, 640>}, {pipeline_mode = #tpu.pipeline_mode<synchronous>, transform_indices = @transform_1, window_bounds = array<i64: 640, 256>}, {pipeline_mode = #tpu.pipeline_mode<synchronous>, transform_indices = @transform_2, window_bounds = array<i64: 1, 256>}, {pipeline_mode = #tpu.pipeline_mode<synchronous>, transform_indices = @transform_3, window_bounds = array<i64: 256, 128>}, {pipeline_mode = #tpu.pipeline_mode<synchronous>, transform_indices = @transform_4, window_bounds = array<i64: 1, 128>}, {pipeline_mode = #tpu.pipeline_mode<synchronous>, transform_indices = @transform_5, window_bounds = array<i64: 128, 128>}, {pipeline_mode = #tpu.pipeline_mode<synchronous>, transform_indices = @transform_6, window_bounds = array<i64: 1, 128>}, {pipeline_mode = #tpu.pipeline_mode<synchronous>, transform_indices = @transform_7, window_bounds = array<i64: 128, 128>}, {pipeline_mode = #tpu.pipeline_mode<synchronous>, transform_indices = @transform_8, window_bounds = array<i64: 1, 128>}, {pipeline_mode = #tpu.pipeline_mode<synchronous>, transform_indices = @transform_9, window_bounds = array<i64: 128, 256>}, {pipeline_mode = #tpu.pipeline_mode<synchronous>, transform_indices = @transform_10, window_bounds = array<i64: 1, 256>}, {pipeline_mode = #tpu.pipeline_mode<synchronous>, transform_indices = @transform_11, window_bounds = array<i64: 256, 640>}, {pipeline_mode = #tpu.pipeline_mode<synchronous>, transform_indices = @transform_12, window_bounds = array<i64: 1, 640>}, {transform_indices = @transform_13, window_bounds = array<i64: 8, 128>}, {transform_indices = @transform_14, window_bounds = array<i64: 8, 640>}]} {
    %c0 = arith.constant 0 : index
    %c0_0 = arith.constant 0 : index
    %0 = vector.load %arg1[%c0, %c0_0] : memref<8x640xbf16, #tpu.memory_space<vmem>>, vector<8x640xbf16>
    %c0_1 = arith.constant 0 : index
    %c0_2 = arith.constant 0 : index
    %1 = vector.load %arg2[%c0_1, %c0_2] : memref<640x256xbf16, #tpu.memory_space<vmem>>, vector<640x256xbf16>
    %cst = arith.constant dense<0.000000e+00> : vector<8x256xf32>
    %2 = tpu.matmul %0, %1, %cst {dimension_numbers = #tpu.dot_dimension_numbers<[1], [0], [0], [1], [0, 0, 1, 1], [], []>} : vector<8x640xbf16>, vector<640x256xbf16>, vector<8x256xf32> -> vector<8x256xf32>
    %c0_3 = arith.constant 0 : index
    %c0_4 = arith.constant 0 : index
    %3 = vector.load %arg3[%c0_3, %c0_4] : memref<1x256xf32, #tpu.memory_space<vmem>>, vector<1x256xf32>
    %4 = vector.broadcast %3 : vector<1x256xf32> to vector<8x256xf32>
    %5 = arith.addf %2, %4 : vector<8x256xf32>
    %6 = math.tanh %5 : vector<8x256xf32>
    %7 = arith.truncf %6 : vector<8x256xf32> to vector<8x256xbf16>
    %c0_5 = arith.constant 0 : index
    %c0_6 = arith.constant 0 : index
    %8 = vector.load %arg4[%c0_5, %c0_6] : memref<256x128xbf16, #tpu.memory_space<vmem>>, vector<256x128xbf16>
    %cst_7 = arith.constant dense<0.000000e+00> : vector<8x128xf32>
    %9 = tpu.matmul %7, %8, %cst_7 {dimension_numbers = #tpu.dot_dimension_numbers<[1], [0], [0], [1], [0, 0, 1, 1], [], []>} : vector<8x256xbf16>, vector<256x128xbf16>, vector<8x128xf32> -> vector<8x128xf32>
    %c0_8 = arith.constant 0 : index
    %c0_9 = arith.constant 0 : index
    %10 = vector.load %arg5[%c0_8, %c0_9] : memref<1x128xf32, #tpu.memory_space<vmem>>, vector<1x128xf32>
    %11 = vector.broadcast %10 : vector<1x128xf32> to vector<8x128xf32>
    %12 = arith.addf %9, %11 : vector<8x128xf32>
    %13 = math.tanh %12 : vector<8x128xf32>
    %14 = arith.truncf %13 : vector<8x128xf32> to vector<8x128xbf16>
    %c0_10 = arith.constant 0 : index
    %c0_11 = arith.constant 0 : index
    %15 = vector.load %arg6[%c0_10, %c0_11] : memref<128x128xbf16, #tpu.memory_space<vmem>>, vector<128x128xbf16>
    %cst_12 = arith.constant dense<0.000000e+00> : vector<8x128xf32>
    %16 = tpu.matmul %14, %15, %cst_12 {dimension_numbers = #tpu.dot_dimension_numbers<[1], [0], [0], [1], [0, 0, 1, 1], [], []>} : vector<8x128xbf16>, vector<128x128xbf16>, vector<8x128xf32> -> vector<8x128xf32>
    %c0_13 = arith.constant 0 : index
    %c0_14 = arith.constant 0 : index
    %17 = vector.load %arg7[%c0_13, %c0_14] : memref<1x128xf32, #tpu.memory_space<vmem>>, vector<1x128xf32>
    %18 = vector.broadcast %17 : vector<1x128xf32> to vector<8x128xf32>
    %19 = arith.addf %16, %18 : vector<8x128xf32>
    %c0_15 = arith.constant 0 : index
    %c0_16 = arith.constant 0 : index
    %20 = vector.load %arg14[%c0_15, %c0_16] : memref<8x128xf32, #tpu.memory_space<vmem>>, vector<8x128xf32>
    tpu.vector_store %arg14[%c0_15, %c0_16], %19 {strides = array<i32>} : memref<8x128xf32, #tpu.memory_space<vmem>>, vector<8x128xf32>,
    %21 = arith.truncf %19 : vector<8x128xf32> to vector<8x128xbf16>
    %c0_17 = arith.constant 0 : index
    %c0_18 = arith.constant 0 : index
    %22 = vector.load %arg8[%c0_17, %c0_18] : memref<128x128xbf16, #tpu.memory_space<vmem>>, vector<128x128xbf16>
    %cst_19 = arith.constant dense<0.000000e+00> : vector<8x128xf32>
    %23 = tpu.matmul %21, %22, %cst_19 {dimension_numbers = #tpu.dot_dimension_numbers<[1], [0], [0], [1], [0, 0, 1, 1], [], []>} : vector<8x128xbf16>, vector<128x128xbf16>, vector<8x128xf32> -> vector<8x128xf32>
    %c0_20 = arith.constant 0 : index
    %c0_21 = arith.constant 0 : index
    %24 = vector.load %arg9[%c0_20, %c0_21] : memref<1x128xf32, #tpu.memory_space<vmem>>, vector<1x128xf32>
    %25 = vector.broadcast %24 : vector<1x128xf32> to vector<8x128xf32>
    %26 = arith.addf %23, %25 : vector<8x128xf32>
    %27 = math.tanh %26 : vector<8x128xf32>
    %28 = arith.truncf %27 : vector<8x128xf32> to vector<8x128xbf16>
    %c0_22 = arith.constant 0 : index
    %c0_23 = arith.constant 0 : index
    %29 = vector.load %arg10[%c0_22, %c0_23] : memref<128x256xbf16, #tpu.memory_space<vmem>>, vector<128x256xbf16>
    %cst_24 = arith.constant dense<0.000000e+00> : vector<8x256xf32>
    %30 = tpu.matmul %28, %29, %cst_24 {dimension_numbers = #tpu.dot_dimension_numbers<[1], [0], [0], [1], [0, 0, 1, 1], [], []>} : vector<8x128xbf16>, vector<128x256xbf16>, vector<8x256xf32> -> vector<8x256xf32>
    %c0_25 = arith.constant 0 : index
    %c0_26 = arith.constant 0 : index
    %31 = vector.load %arg11[%c0_25, %c0_26] : memref<1x256xf32, #tpu.memory_space<vmem>>, vector<1x256xf32>
    %32 = vector.broadcast %31 : vector<1x256xf32> to vector<8x256xf32>
    %33 = arith.addf %30, %32 : vector<8x256xf32>
    %34 = math.tanh %33 : vector<8x256xf32>
    %35 = arith.truncf %34 : vector<8x256xf32> to vector<8x256xbf16>
    %c0_27 = arith.constant 0 : index
    %c0_28 = arith.constant 0 : index
    %36 = vector.load %arg12[%c0_27, %c0_28] : memref<256x640xbf16, #tpu.memory_space<vmem>>, vector<256x640xbf16>
    %cst_29 = arith.constant dense<0.000000e+00> : vector<8x640xf32>
    %37 = tpu.matmul %35, %36, %cst_29 {dimension_numbers = #tpu.dot_dimension_numbers<[1], [0], [0], [1], [0, 0, 1, 1], [], []>} : vector<8x256xbf16>, vector<256x640xbf16>, vector<8x640xf32> -> vector<8x640xf32>
    %c0_30 = arith.constant 0 : index
    %c0_31 = arith.constant 0 : index
    %38 = vector.load %arg13[%c0_30, %c0_31] : memref<1x640xf32, #tpu.memory_space<vmem>>, vector<1x640xf32>
    %39 = vector.broadcast %38 : vector<1x640xf32> to vector<8x640xf32>
    %40 = arith.addf %37, %39 : vector<8x640xf32>
    %c0_32 = arith.constant 0 : index
    %c0_33 = arith.constant 0 : index
    %41 = vector.load %arg15[%c0_32, %c0_33] : memref<8x640xf32, #tpu.memory_space<vmem>>, vector<8x640xf32>
    tpu.vector_store %arg15[%c0_32, %c0_33], %40 {strides = array<i32>} : memref<8x640xf32, #tpu.memory_space<vmem>>, vector<8x640xf32>,
    return
  }
  func.func @transform_0(%arg0: i32) -> (i32, i32) {
    %c0_i32 = arith.constant 0 : i32
    %c0_i32_0 = arith.constant 0 : i32
    return %arg0, %c0_i32 : i32, i32
  }
  func.func @transform_1(%arg0: i32) -> (i32, i32) {
    %c0_i32 = arith.constant 0 : i32
    %c0_i32_0 = arith.constant 0 : i32
    %c0_i32_1 = arith.constant 0 : i32
    return %c0_i32, %c0_i32_0 : i32, i32
  }
  func.func @transform_2(%arg0: i32) -> (i32, i32) {
    %c0_i32 = arith.constant 0 : i32
    %c0_i32_0 = arith.constant 0 : i32
    %c0_i32_1 = arith.constant 0 : i32
    return %c0_i32, %c0_i32_0 : i32, i32
  }
  func.func @transform_3(%arg0: i32) -> (i32, i32) {
    %c0_i32 = arith.constant 0 : i32
    %c0_i32_0 = arith.constant 0 : i32
    %c0_i32_1 = arith.constant 0 : i32
    return %c0_i32, %c0_i32_0 : i32, i32
  }
  func.func @transform_4(%arg0: i32) -> (i32, i32) {
    %c0_i32 = arith.constant 0 : i32
    %c0_i32_0 = arith.constant 0 : i32
    %c0_i32_1 = arith.constant 0 : i32
    return %c0_i32, %c0_i32_0 : i32, i32
  }
  func.func @transform_5(%arg0: i32) -> (i32, i32) {
    %c0_i32 = arith.constant 0 : i32
    %c0_i32_0 = arith.constant 0 : i32
    %c0_i32_1 = arith.constant 0 : i32
    return %c0_i32, %c0_i32_0 : i32, i32
  }
  func.func @transform_6(%arg0: i32) -> (i32, i32) {
    %c0_i32 = arith.constant 0 : i32
    %c0_i32_0 = arith.constant 0 : i32
    %c0_i32_1 = arith.constant 0 : i32
    return %c0_i32, %c0_i32_0 : i32, i32
  }
  func.func @transform_7(%arg0: i32) -> (i32, i32) {
    %c0_i32 = arith.constant 0 : i32
    %c0_i32_0 = arith.constant 0 : i32
    %c0_i32_1 = arith.constant 0 : i32
    return %c0_i32, %c0_i32_0 : i32, i32
  }
  func.func @transform_8(%arg0: i32) -> (i32, i32) {
    %c0_i32 = arith.constant 0 : i32
    %c0_i32_0 = arith.constant 0 : i32
    %c0_i32_1 = arith.constant 0 : i32
    return %c0_i32, %c0_i32_0 : i32, i32
  }
  func.func @transform_9(%arg0: i32) -> (i32, i32) {
    %c0_i32 = arith.constant 0 : i32
    %c0_i32_0 = arith.constant 0 : i32
    %c0_i32_1 = arith.constant 0 : i32
    return %c0_i32, %c0_i32_0 : i32, i32
  }
  func.func @transform_10(%arg0: i32) -> (i32, i32) {
    %c0_i32 = arith.constant 0 : i32
    %c0_i32_0 = arith.constant 0 : i32
    %c0_i32_1 = arith.constant 0 : i32
    return %c0_i32, %c0_i32_0 : i32, i32
  }
  func.func @transform_11(%arg0: i32) -> (i32, i32) {
    %c0_i32 = arith.constant 0 : i32
    %c0_i32_0 = arith.constant 0 : i32
    %c0_i32_1 = arith.constant 0 : i32
    return %c0_i32, %c0_i32_0 : i32, i32
  }
  func.func @transform_12(%arg0: i32) -> (i32, i32) {
    %c0_i32 = arith.constant 0 : i32
    %c0_i32_0 = arith.constant 0 : i32
    %c0_i32_1 = arith.constant 0 : i32
    return %c0_i32, %c0_i32_0 : i32, i32
  }
  func.func @transform_13(%arg0: i32) -> (i32, i32) {
    %c0_i32 = arith.constant 0 : i32
    %c0_i32_0 = arith.constant 0 : i32
    return %arg0, %c0_i32 : i32, i32
  }
  func.func @transform_14(%arg0: i32) -> (i32, i32) {
    %c0_i32 = arith.constant 0 : i32
    %c0_i32_0 = arith.constant 0 : i32
    return %arg0, %c0_i32 : i32, i32
  }
}

</mosaic_0001>

<llo_original>
// kernel: tpu_custom_call.1
$region0: #{tpu_custom_call.1}
  #allocation0 [shape = 'u32[]', space=smem, size = 0x4, offset = 0x4, fixed_abs, tag = 'smem constant byte address 0x4 - core index']
  #allocation1 [shape = 'u32[144,128]{1,0:T(1,128)}', space=vmem, size = 0x12000, scoped, tag = 'internal scratch']
  %s0 = inlined_call_operand.hbm [shape: bf16[8,640], index: 0, kind: input, shape index: {}]
  %s1 = inlined_call_operand.hbm [shape: bf16[640,256], index: 1, kind: input, shape index: {}]
  %s2 = inlined_call_operand.vmem [shape: f32[1,256], index: 2, kind: input, shape index: {}]
  %s3 = inlined_call_operand.hbm [shape: bf16[256,128], index: 3, kind: input, shape index: {}]
  %s4 = inlined_call_operand.hbm [shape: f32[1,128], index: 4, kind: input, shape index: {}]
  %s5 = inlined_call_operand.hbm [shape: bf16[128,128], index: 5, kind: input, shape index: {}]
  %s6 = inlined_call_operand.vmem [shape: f32[1,128], index: 6, kind: input, shape index: {}]
  %s7 = inlined_call_operand.hbm [shape: bf16[128,128], index: 7, kind: input, shape index: {}]
  %s8 = inlined_call_operand.vmem [shape: f32[1,128], index: 8, kind: input, shape index: {}]
  %s9 = inlined_call_operand.hbm [shape: bf16[128,256], index: 9, kind: input, shape index: {}]
  %s10 = inlined_call_operand.vmem [shape: f32[1,256], index: 10, kind: input, shape index: {}]
  %s11 = inlined_call_operand.hbm [shape: bf16[256,640], index: 11, kind: input, shape index: {}]
  %s12 = inlined_call_operand.vmem [shape: f32[1,640], index: 12, kind: input, shape index: {}]
  %s13 = inlined_call_operand.hbm [shape: f32[8,128], index: 13, kind: output, shape index: {0}]
  %s14 = inlined_call_operand.hbm [shape: f32[8,640], index: 14, kind: output, shape index: {1}]
  %15 = xla_tuple %s13, %s14
  %s16 = sld [smem:[#allocation0]]
  $region102: #{tpu_custom_call.1} parent=0
    _
  %s18 = ssub.s32 1, %s16
  %s19 = scalar_select 0, %s18, %s16
  $region1: #{tpu_custom_call.1} parent=0
    #allocation2 [shape = 'u8[10240]{0}', space=vmem, size = 0x2800, scoped, tag = 'input window, operand 0, single buffered']
    #allocation3 [shape = 's32[1]{0}', space=sflag, size = 0x4, scoped, tag = 'scoped memory for tpu_custom_call.1']
    #allocation4 [shape = 's32[1]{0}', space=sflag, size = 0x4, scoped, tag = 'scoped memory for tpu_custom_call.1']
    #allocation5 [shape = 'u8[327680]{0}', space=vmem, size = 0x50000, scoped, tag = 'input window, operand 1, single buffered']
    #allocation6 [shape = 's32[1]{0}', space=sflag, size = 0x4, scoped, tag = 'scoped memory for tpu_custom_call.1']
    #allocation7 [shape = 'u8[65536]{0}', space=vmem, size = 0x10000, scoped, tag = 'input window, operand 3, single buffered']
    #allocation8 [shape = 'u8[512]{0}', space=vmem, size = 0x400, scoped, tag = 'input window, operand 4, single buffered']
    #allocation9 [shape = 's32[1]{0}', space=sflag, size = 0x4, scoped, tag = 'scoped memory for tpu_custom_call.1']
    #allocation10 [shape = 'u8[32768]{0}', space=vmem, size = 0x8000, scoped, tag = 'input window, operand 5, single buffered']
    #allocation11 [shape = 'u8[32768]{0}', space=vmem, size = 0x8000, scoped, tag = 'input window, operand 7, single buffered']
    #allocation12 [shape = 's32[1]{0}', space=sflag, size = 0x4, scoped, tag = 'scoped memory for tpu_custom_call.1']
    #allocation13 [shape = 'u8[65536]{0}', space=vmem, size = 0x10000, scoped, tag = 'input window, operand 9, single buffered']
    #allocation14 [shape = 'u8[327680]{0}', space=vmem, size = 0x50000, scoped, tag = 'input window, operand 11, single buffered']
    #allocation15 [shape = 's32[1]{0}', space=sflag, size = 0x4, scoped, tag = 'scoped memory for tpu_custom_call.1']
    #allocation16 [shape = 'u8[4096]{0}', space=vmem, size = 0x1000, scoped, tag = 'output window, operand 0, single buffered']
    #allocation17 [shape = 'u8[20480]{0}', space=vmem, size = 0x5000, scoped, tag = 'output window, operand 1, single buffered']
    #allocation18 [shape = 's32[1]{0}', space=sflag, size = 0x4, scoped, tag = 'scoped memory for tpu_custom_call.1']
    %20 = vsyncpa [#allocation3], 0
    %21 = vsyncpa [#allocation6], 0
    %22 = vsyncpa [#allocation9], 0
    %23 = vsyncpa [#allocation12], 0
    %24 = vsyncpa [#allocation15], 0
    %25 = vsyncpa [#allocation4], 0
    %26 = vsyncpa [#allocation18], 0
    // Predicated region
    $region2: #{tpu_custom_call.1} parent=1 // pred_check
      _
    $region3: #{tpu_custom_call.1} parent=1 // pred_check_branch
      %28 = sbr.rel (0) target = $region5
    $region4: #{tpu_custom_call.1} parent=1 // pred_region
      %s30 = ssub.s32 320, 320
      %31 = vsyncadd [#allocation3], %s30
      %s33 = sshll.u32 [#allocation2], 4
      %s34 = int_to_ptr.vmem [resolvable:$true] %s33
      %36 = dma.hbm_to_vmem [thread:$0]  %s0, 320, %s34, [#allocation3]
    $region5: #{tpu_custom_call.1} parent=1 // pred_fallthru
      _
    // Predicated region
    $region6: #{tpu_custom_call.1} parent=1 // pred_check
      _
    $region7: #{tpu_custom_call.1} parent=1 // pred_check_branch
      %38 = sbr.rel (0) target = $region9
    $region8: #{tpu_custom_call.1} parent=1 // pred_region
      %s40 = ssub.s32 10240, 10240
      %41 = vsyncadd [#allocation6], %s40
      %s42 = sshll.u32 [#allocation5], 4
      %s43 = int_to_ptr.vmem [resolvable:$true] %s42
      %48 = dma.hbm_to_vmem [thread:$0]  %s1, 10240, %s43, [#allocation6], 128, 128, 8
    $region9: #{tpu_custom_call.1} parent=1 // pred_fallthru
      _
    // Predicated region
    $region10: #{tpu_custom_call.1} parent=1 // pred_check
      _
    $region11: #{tpu_custom_call.1} parent=1 // pred_check_branch
      %50 = sbr.rel (0) target = $region13
    $region12: #{tpu_custom_call.1} parent=1 // pred_region
      _
    $region13: #{tpu_custom_call.1} parent=1 // pred_fallthru
      _
    // Predicated region
    $region14: #{tpu_custom_call.1} parent=1 // pred_check
      _
    $region15: #{tpu_custom_call.1} parent=1 // pred_check_branch
      %52 = sbr.rel (0) target = $region17
    $region16: #{tpu_custom_call.1} parent=1 // pred_region
      %s54 = ssub.s32 2048, 2048
      %55 = vsyncadd [#allocation6], %s54
      %s56 = sshll.u32 [#allocation7], 4
      %s57 = int_to_ptr.vmem [resolvable:$true] %s56
      %62 = dma.hbm_to_vmem [thread:$0]  %s3, 2048, %s57, [#allocation6], 64, 64, 4
    $region17: #{tpu_custom_call.1} parent=1 // pred_fallthru
      _
    // Predicated region
    $region18: #{tpu_custom_call.1} parent=1 // pred_check
      _
    $region19: #{tpu_custom_call.1} parent=1 // pred_check_branch
      %64 = sbr.rel (0) target = $region21
    $region20: #{tpu_custom_call.1} parent=1 // pred_region
      %s66 = ssub.s32 16, 16
      %67 = vsyncadd [#allocation9], %s66
      %s69 = sshll.u32 [#allocation8], 4
      %s70 = int_to_ptr.vmem [resolvable:$true] %s69
      %72 = dma.hbm_to_vmem [thread:$0]  %s4, 16, %s70, [#allocation9]
    $region21: #{tpu_custom_call.1} parent=1 // pred_fallthru
      _
    // Predicated region
    $region22: #{tpu_custom_call.1} parent=1 // pred_check
      _
    $region23: #{tpu_custom_call.1} parent=1 // pred_check_branch
      %74 = sbr.rel (0) target = $region25
    $region24: #{tpu_custom_call.1} parent=1 // pred_region
      %s76 = ssub.s32 1024, 1024
      %77 = vsyncadd [#allocation9], %s76
      %s78 = sshll.u32 [#allocation10], 4
      %s79 = int_to_ptr.vmem [resolvable:$true] %s78
      %84 = dma.hbm_to_vmem [thread:$0]  %s5, 1024, %s79, [#allocation9], 64, 64, 4
    $region25: #{tpu_custom_call.1} parent=1 // pred_fallthru
      _
    // Predicated region
    $region26: #{tpu_custom_call.1} parent=1 // pred_check
      _
    $region27: #{tpu_custom_call.1} parent=1 // pred_check_branch
      %86 = sbr.rel (0) target = $region29
    $region28: #{tpu_custom_call.1} parent=1 // pred_region
      _
    $region29: #{tpu_custom_call.1} parent=1 // pred_fallthru
      _
    // Predicated region
    $region30: #{tpu_custom_call.1} parent=1 // pred_check
      _
    $region31: #{tpu_custom_call.1} parent=1 // pred_check_branch
      %88 = sbr.rel (0) target = $region33
    $region32: #{tpu_custom_call.1} parent=1 // pred_region
      %s90 = ssub.s32 1024, 1024
      %91 = vsyncadd [#allocation12], %s90
      %s92 = sshll.u32 [#allocation11], 4
      %s93 = int_to_ptr.vmem [resolvable:$true] %s92
      %98 = dma.hbm_to_vmem [thread:$0]  %s7, 1024, %s93, [#allocation12], 64, 64, 4
    $region33: #{tpu_custom_call.1} parent=1 // pred_fallthru
      _
    // Predicated region
    $region34: #{tpu_custom_call.1} parent=1 // pred_check
      _
    $region35: #{tpu_custom_call.1} parent=1 // pred_check_branch
      %100 = sbr.rel (0) target = $region37
    $region36: #{tpu_custom_call.1} parent=1 // pred_region
      _
    $region37: #{tpu_custom_call.1} parent=1 // pred_fallthru
      _
    // Predicated region
    $region38: #{tpu_custom_call.1} parent=1 // pred_check
      _
    $region39: #{tpu_custom_call.1} parent=1 // pred_check_branch
      %102 = sbr.rel (0) target = $region41
    $region40: #{tpu_custom_call.1} parent=1 // pred_region
      %s104 = ssub.s32 2048, 2048
      %105 = vsyncadd [#allocation12], %s104
      %s106 = sshll.u32 [#allocation13], 4
      %s107 = int_to_ptr.vmem [resolvable:$true] %s106
      %112 = dma.hbm_to_vmem [thread:$0]  %s9, 2048, %s107, [#allocation12], 128, 128, 8
    $region41: #{tpu_custom_call.1} parent=1 // pred_fallthru
      _
    // Predicated region
    $region42: #{tpu_custom_call.1} parent=1 // pred_check
      _
    $region43: #{tpu_custom_call.1} parent=1 // pred_check_branch
      %114 = sbr.rel (0) target = $region45
    $region44: #{tpu_custom_call.1} parent=1 // pred_region
      _
    $region45: #{tpu_custom_call.1} parent=1 // pred_fallthru
      _
    // Predicated region
    $region46: #{tpu_custom_call.1} parent=1 // pred_check
      _
    $region47: #{tpu_custom_call.1} parent=1 // pred_check_branch
      %116 = sbr.rel (0) target = $region49
    $region48: #{tpu_custom_call.1} parent=1 // pred_region
      %s118 = ssub.s32 10240, 10240
      %119 = vsyncadd [#allocation15], %s118
      %s120 = sshll.u32 [#allocation14], 4
      %s121 = int_to_ptr.vmem [resolvable:$true] %s120
      %126 = dma.hbm_to_vmem [thread:$0]  %s11, 10240, %s121, [#allocation15], 320, 320, 20
    $region49: #{tpu_custom_call.1} parent=1 // pred_fallthru
      _
    // Predicated region
    $region50: #{tpu_custom_call.1} parent=1 // pred_check
      _
    $region51: #{tpu_custom_call.1} parent=1 // pred_check_branch
      %128 = sbr.rel (0) target = $region53
    $region52: #{tpu_custom_call.1} parent=1 // pred_region
      _
    $region53: #{tpu_custom_call.1} parent=1 // pred_fallthru
      _
    // Predicated region
    $region54: #{tpu_custom_call.1} parent=1 // pred_check
      _
    $region55: #{tpu_custom_call.1} parent=1 // pred_check_branch
      %130 = sbr.rel (0) target = $region57
    $region56: #{tpu_custom_call.1} parent=1 // pred_region
      %131 = dma.done [#allocation3], 320
    $region57: #{tpu_custom_call.1} parent=1 // pred_fallthru
      _
    // Predicated region
    $region58: #{tpu_custom_call.1} parent=1 // pred_check
      _
    $region59: #{tpu_custom_call.1} parent=1 // pred_check_branch
      %133 = sbr.rel (0) target = $region61
    $region60: #{tpu_custom_call.1} parent=1 // pred_region
      %134 = dma.done [#allocation6], 10240
    $region61: #{tpu_custom_call.1} parent=1 // pred_fallthru
      _
    // Predicated region
    $region62: #{tpu_custom_call.1} parent=1 // pred_check
      _
    $region63: #{tpu_custom_call.1} parent=1 // pred_check_branch
      %136 = sbr.rel (0) target = $region65
    $region64: #{tpu_custom_call.1} parent=1 // pred_region
      %137 = dma.done [#allocation6], 2048
    $region65: #{tpu_custom_call.1} parent=1 // pred_fallthru
      _
    // Predicated region
    $region66: #{tpu_custom_call.1} parent=1 // pred_check
      _
    $region67: #{tpu_custom_call.1} parent=1 // pred_check_branch
      %139 = sbr.rel (0) target = $region69
    $region68: #{tpu_custom_call.1} parent=1 // pred_region
      %140 = dma.done [#allocation9], 16
    $region69: #{tpu_custom_call.1} parent=1 // pred_fallthru
      _
    // Predicated region
    $region70: #{tpu_custom_call.1} parent=1 // pred_check
      _
    $region71: #{tpu_custom_call.1} parent=1 // pred_check_branch
      %142 = sbr.rel (0) target = $region73
    $region72: #{tpu_custom_call.1} parent=1 // pred_region
      %143 = dma.done [#allocation9], 1024
    $region73: #{tpu_custom_call.1} parent=1 // pred_fallthru
      _
    // Predicated region
    $region74: #{tpu_custom_call.1} parent=1 // pred_check
      _
    $region75: #{tpu_custom_call.1} parent=1 // pred_check_branch
      %145 = sbr.rel (0) target = $region77
    $region76: #{tpu_custom_call.1} parent=1 // pred_region
      %146 = dma.done [#allocation12], 1024
    $region77: #{tpu_custom_call.1} parent=1 // pred_fallthru
      _
    // Predicated region
    $region78: #{tpu_custom_call.1} parent=1 // pred_check
      _
    $region79: #{tpu_custom_call.1} parent=1 // pred_check_branch
      %148 = sbr.rel (0) target = $region81
    $region80: #{tpu_custom_call.1} parent=1 // pred_region
      %149 = dma.done [#allocation12], 2048
    $region81: #{tpu_custom_call.1} parent=1 // pred_fallthru
      _
    // Predicated region
    $region82: #{tpu_custom_call.1} parent=1 // pred_check
      _
    $region83: #{tpu_custom_call.1} parent=1 // pred_check_branch
      %151 = sbr.rel (0) target = $region85
    $region84: #{tpu_custom_call.1} parent=1 // pred_region
      %152 = dma.done [#allocation15], 10240
    $region85: #{tpu_custom_call.1} parent=1 // pred_fallthru
      _
    %v154 = vld [vmem:[#allocation2] sm:$0xff]
    %v155 = vld [vmem:[#allocation2 + $0x8] sm:$0xff]
    %v156 = vld [vmem:[#allocation2 + $0x10] sm:$0xf]
    %v157 = vld [vmem:[#allocation5] sm:$0xff]
    %v158 = vld [vmem:[#allocation5 + $0x8] sm:$0xff]
    %v159 = vld [vmem:[#allocation5 + $0x10] sm:$0xff]
    %v160 = vld [vmem:[#allocation5 + $0x18] sm:$0xff]
    %v161 = vld [vmem:[#allocation5 + $0x20] sm:$0xff]
    %v162 = vld [vmem:[#allocation5 + $0x28] sm:$0xff]
    %v163 = vld [vmem:[#allocation5 + $0x30] sm:$0xff]
    %v164 = vld [vmem:[#allocation5 + $0x38] sm:$0xff]
    %v165 = vld [vmem:[#allocation5 + $0x40] sm:$0xff]
    %v166 = vld [vmem:[#allocation5 + $0x48] sm:$0xff]
    %v167 = vld [vmem:[#allocation5 + $0x50] sm:$0xff]
    %v168 = vld [vmem:[#allocation5 + $0x58] sm:$0xff]
    %v169 = vld [vmem:[#allocation5 + $0x60] sm:$0xff]
    %v170 = vld [vmem:[#allocation5 + $0x68] sm:$0xff]
    %v171 = vld [vmem:[#allocation5 + $0x70] sm:$0xff]
    %v172 = vld [vmem:[#allocation5 + $0x78] sm:$0xff]
    %v173 = vld [vmem:[#allocation5 + $0x80] sm:$0xff]
    %v174 = vld [vmem:[#allocation5 + $0x88] sm:$0xff]
    %v175 = vld [vmem:[#allocation5 + $0x90] sm:$0xff]
    %v176 = vld [vmem:[#allocation5 + $0x98] sm:$0xff]
    %v177 = vld [vmem:[#allocation5 + $0xa0] sm:$0xff]
    %v178 = vld [vmem:[#allocation5 + $0xa8] sm:$0xff]
    %v179 = vld [vmem:[#allocation5 + $0xb0] sm:$0xff]
    %v180 = vld [vmem:[#allocation5 + $0xb8] sm:$0xff]
    %v181 = vld [vmem:[#allocation5 + $0xc0] sm:$0xff]
    %v182 = vld [vmem:[#allocation5 + $0xc8] sm:$0xff]
    %v183 = vld [vmem:[#allocation5 + $0xd0] sm:$0xff]
    %v184 = vld [vmem:[#allocation5 + $0xd8] sm:$0xff]
    %v185 = vld [vmem:[#allocation5 + $0xe0] sm:$0xff]
    %v186 = vld [vmem:[#allocation5 + $0xe8] sm:$0xff]
    %v187 = vld [vmem:[#allocation5 + $0xf0] sm:$0xff]
    %v188 = vld [vmem:[#allocation5 + $0xf8] sm:$0xff]
    %v189 = vld [vmem:[#allocation5 + $0x100] sm:$0xff]
    %v190 = vld [vmem:[#allocation5 + $0x108] sm:$0xff]
    %v191 = vld [vmem:[#allocation5 + $0x110] sm:$0xff]
    %v192 = vld [vmem:[#allocation5 + $0x118] sm:$0xff]
    %v193 = vld [vmem:[#allocation5 + $0x120] sm:$0xff]
    %v194 = vld [vmem:[#allocation5 + $0x128] sm:$0xff]
    %v195 = vld [vmem:[#allocation5 + $0x130] sm:$0xff]
    %v196 = vld [vmem:[#allocation5 + $0x138] sm:$0xff]
    %v197 = vld [vmem:[#allocation5 + $0x140] sm:$0xff]
    %v198 = vld [vmem:[#allocation5 + $0x148] sm:$0xff]
    %v199 = vld [vmem:[#allocation5 + $0x150] sm:$0xff]
    %v200 = vld [vmem:[#allocation5 + $0x158] sm:$0xff]
    %v201 = vld [vmem:[#allocation5 + $0x160] sm:$0xff]
    %v202 = vld [vmem:[#allocation5 + $0x168] sm:$0xff]
    %v203 = vld [vmem:[#allocation5 + $0x170] sm:$0xff]
    %v204 = vld [vmem:[#allocation5 + $0x178] sm:$0xff]
    %v205 = vld [vmem:[#allocation5 + $0x180] sm:$0xff]
    %v206 = vld [vmem:[#allocation5 + $0x188] sm:$0xff]
    %v207 = vld [vmem:[#allocation5 + $0x190] sm:$0xff]
    %v208 = vld [vmem:[#allocation5 + $0x198] sm:$0xff]
    %v209 = vld [vmem:[#allocation5 + $0x1a0] sm:$0xff]
    %v210 = vld [vmem:[#allocation5 + $0x1a8] sm:$0xff]
    %v211 = vld [vmem:[#allocation5 + $0x1b0] sm:$0xff]
    %v212 = vld [vmem:[#allocation5 + $0x1b8] sm:$0xff]
    %v213 = vld [vmem:[#allocation5 + $0x1c0] sm:$0xff]
    %v214 = vld [vmem:[#allocation5 + $0x1c8] sm:$0xff]
    %v215 = vld [vmem:[#allocation5 + $0x1d0] sm:$0xff]
    %v216 = vld [vmem:[#allocation5 + $0x1d8] sm:$0xff]
    %v217 = vld [vmem:[#allocation5 + $0x1e0] sm:$0xff]
    %v218 = vld [vmem:[#allocation5 + $0x1e8] sm:$0xff]
    %v219 = vld [vmem:[#allocation5 + $0x1f0] sm:$0xff]
    %v220 = vld [vmem:[#allocation5 + $0x1f8] sm:$0xff]
    %v221 = vld [vmem:[#allocation5 + $0x200] sm:$0xff]
    %v222 = vld [vmem:[#allocation5 + $0x208] sm:$0xff]
    %v223 = vld [vmem:[#allocation5 + $0x210] sm:$0xff]
    %v224 = vld [vmem:[#allocation5 + $0x218] sm:$0xff]
    %v225 = vld [vmem:[#allocation5 + $0x220] sm:$0xff]
    %v226 = vld [vmem:[#allocation5 + $0x228] sm:$0xff]
    %v227 = vld [vmem:[#allocation5 + $0x230] sm:$0xff]
    %v228 = vld [vmem:[#allocation5 + $0x238] sm:$0xff]
    %v229 = vld [vmem:[#allocation5 + $0x240] sm:$0xff]
    %v230 = vld [vmem:[#allocation5 + $0x248] sm:$0xff]
    %v231 = vld [vmem:[#allocation5 + $0x250] sm:$0xff]
    %v232 = vld [vmem:[#allocation5 + $0x258] sm:$0xff]
    %v233 = vld [vmem:[#allocation5 + $0x260] sm:$0xff]
    %v234 = vld [vmem:[#allocation5 + $0x268] sm:$0xff]
    %v235 = vld [vmem:[#allocation5 + $0x270] sm:$0xff]
    %v236 = vld [vmem:[#allocation5 + $0x278] sm:$0xff]
    %v237 = vld [vmem:[%s2] sm:$0x3]
    %v239 = vlaneseq
    %v240 = vshrl.u32 %v239, 7
    %v241 = vsub.s32 0, %v240
    %v242 = vrot.slane %v237, %v241
    %v243 = vlaneseq
    %v244 = vshrl.u32 %v243, 7
    %v245 = vsub.s32 1, %v244
    %v246 = vrot.slane %v237, %v245
    %v252 = vunpack.c.l.b16 %v154
    %v253 = vunpack.c.h.b16 %v154
    %v254 = vunpack.c.l.b16 %v155
    %v255 = vunpack.c.h.b16 %v155
    %v256 = vunpack.c.l.b16 %v156
    %v257 = vpack.c.b16 %v252, %v252
    %v258 = vpack.c.b16 %v253, %v253
    %v259 = vpack.c.b16 %v254, %v254
    %v260 = vpack.c.b16 %v255, %v255
    %v261 = vpack.c.b16 %v256, %v256
    %v347 = vunpack.c.l.b16 %v157
    %v348 = vunpack.c.h.b16 %v157
    %v349 = vunpack.c.l.b16 %v158
    %v350 = vunpack.c.h.b16 %v158
    %v351 = vunpack.c.l.b16 %v159
    %v352 = vunpack.c.h.b16 %v159
    %v353 = vunpack.c.l.b16 %v160
    %v354 = vunpack.c.h.b16 %v160
    %v355 = vunpack.c.l.b16 %v161
    %v356 = vunpack.c.h.b16 %v161
    %v357 = vunpack.c.l.b16 %v162
    %v358 = vunpack.c.h.b16 %v162
    %v359 = vunpack.c.l.b16 %v163
    %v360 = vunpack.c.h.b16 %v163
    %v361 = vunpack.c.l.b16 %v164
    %v362 = vunpack.c.h.b16 %v164
    %v363 = vunpack.c.l.b16 %v165
    %v364 = vunpack.c.h.b16 %v165
    %v365 = vunpack.c.l.b16 %v166
    %v366 = vunpack.c.h.b16 %v166
    %v367 = vunpack.c.l.b16 %v167
    %v368 = vunpack.c.h.b16 %v167
    %v369 = vunpack.c.l.b16 %v168
    %v370 = vunpack.c.h.b16 %v168
    %v371 = vunpack.c.l.b16 %v169
    %v372 = vunpack.c.h.b16 %v169
    %v373 = vunpack.c.l.b16 %v170
    %v374 = vunpack.c.h.b16 %v170
    %v375 = vunpack.c.l.b16 %v171
    %v376 = vunpack.c.h.b16 %v171
    %v377 = vunpack.c.l.b16 %v172
    %v378 = vunpack.c.h.b16 %v172
    %v379 = vunpack.c.l.b16 %v173
    %v380 = vunpack.c.h.b16 %v173
    %v381 = vunpack.c.l.b16 %v174
    %v382 = vunpack.c.h.b16 %v174
    %v383 = vunpack.c.l.b16 %v175
    %v384 = vunpack.c.h.b16 %v175
    %v385 = vunpack.c.l.b16 %v176
    %v386 = vunpack.c.h.b16 %v176
    %v387 = vunpack.c.l.b16 %v177
    %v388 = vunpack.c.h.b16 %v177
    %v389 = vunpack.c.l.b16 %v178
    %v390 = vunpack.c.h.b16 %v178
    %v391 = vunpack.c.l.b16 %v179
    %v392 = vunpack.c.h.b16 %v179
    %v393 = vunpack.c.l.b16 %v180
    %v394 = vunpack.c.h.b16 %v180
    %v395 = vunpack.c.l.b16 %v181
    %v396 = vunpack.c.h.b16 %v181
    %v397 = vunpack.c.l.b16 %v182
    %v398 = vunpack.c.h.b16 %v182
    %v399 = vunpack.c.l.b16 %v183
    %v400 = vunpack.c.h.b16 %v183
    %v401 = vunpack.c.l.b16 %v184
    %v402 = vunpack.c.h.b16 %v184
    %v403 = vunpack.c.l.b16 %v185
    %v404 = vunpack.c.h.b16 %v185
    %v405 = vunpack.c.l.b16 %v186
    %v406 = vunpack.c.h.b16 %v186
    %v407 = vunpack.c.l.b16 %v187
    %v408 = vunpack.c.h.b16 %v187
    %v409 = vunpack.c.l.b16 %v188
    %v410 = vunpack.c.h.b16 %v188
    %v411 = vunpack.c.l.b16 %v189
    %v412 = vunpack.c.h.b16 %v189
    %v413 = vunpack.c.l.b16 %v190
    %v414 = vunpack.c.h.b16 %v190
    %v415 = vunpack.c.l.b16 %v191
    %v416 = vunpack.c.h.b16 %v191
    %v417 = vunpack.c.l.b16 %v192
    %v418 = vunpack.c.h.b16 %v192
    %v419 = vunpack.c.l.b16 %v193
    %v420 = vunpack.c.h.b16 %v193
    %v421 = vunpack.c.l.b16 %v194
    %v422 = vunpack.c.h.b16 %v194
    %v423 = vunpack.c.l.b16 %v195
    %v424 = vunpack.c.h.b16 %v195
    %v425 = vunpack.c.l.b16 %v196
    %v426 = vunpack.c.h.b16 %v196
    %v427 = vunpack.c.l.b16 %v197
    %v428 = vunpack.c.h.b16 %v197
    %v429 = vunpack.c.l.b16 %v198
    %v430 = vunpack.c.h.b16 %v198
    %v431 = vunpack.c.l.b16 %v199
    %v432 = vunpack.c.h.b16 %v199
    %v433 = vunpack.c.l.b16 %v200
    %v434 = vunpack.c.h.b16 %v200
    %v435 = vunpack.c.l.b16 %v201
    %v436 = vunpack.c.h.b16 %v201
    %v437 = vunpack.c.l.b16 %v202
    %v438 = vunpack.c.h.b16 %v202
    %v439 = vunpack.c.l.b16 %v203
    %v440 = vunpack.c.h.b16 %v203
    %v441 = vunpack.c.l.b16 %v204
    %v442 = vunpack.c.h.b16 %v204
    %v443 = vunpack.c.l.b16 %v205
    %v444 = vunpack.c.h.b16 %v205
    %v445 = vunpack.c.l.b16 %v206
    %v446 = vunpack.c.h.b16 %v206
    %v447 = vunpack.c.l.b16 %v207
    %v448 = vunpack.c.h.b16 %v207
    %v449 = vunpack.c.l.b16 %v208
    %v450 = vunpack.c.h.b16 %v208
    %v451 = vunpack.c.l.b16 %v209
    %v452 = vunpack.c.h.b16 %v209
    %v453 = vunpack.c.l.b16 %v210
    %v454 = vunpack.c.h.b16 %v210
    %v455 = vunpack.c.l.b16 %v211
    %v456 = vunpack.c.h.b16 %v211
    %v457 = vunpack.c.l.b16 %v212
    %v458 = vunpack.c.h.b16 %v212
    %v459 = vunpack.c.l.b16 %v213
    %v460 = vunpack.c.h.b16 %v213
    %v461 = vunpack.c.l.b16 %v214
    %v462 = vunpack.c.h.b16 %v214
    %v463 = vunpack.c.l.b16 %v215
    %v464 = vunpack.c.h.b16 %v215
    %v465 = vunpack.c.l.b16 %v216
    %v466 = vunpack.c.h.b16 %v216
    %v467 = vunpack.c.l.b16 %v217
    %v468 = vunpack.c.h.b16 %v217
    %v469 = vunpack.c.l.b16 %v218
    %v470 = vunpack.c.h.b16 %v218
    %v471 = vunpack.c.l.b16 %v219
    %v472 = vunpack.c.h.b16 %v219
    %v473 = vunpack.c.l.b16 %v220
    %v474 = vunpack.c.h.b16 %v220
    %v475 = vunpack.c.l.b16 %v221
    %v476 = vunpack.c.h.b16 %v221
    %v477 = vunpack.c.l.b16 %v222
    %v478 = vunpack.c.h.b16 %v222
    %v479 = vunpack.c.l.b16 %v223
    %v480 = vunpack.c.h.b16 %v223
    %v481 = vunpack.c.l.b16 %v224
    %v482 = vunpack.c.h.b16 %v224
    %v483 = vunpack.c.l.b16 %v225
    %v484 = vunpack.c.h.b16 %v225
    %v485 = vunpack.c.l.b16 %v226
    %v486 = vunpack.c.h.b16 %v226
    %v487 = vunpack.c.l.b16 %v227
    %v488 = vunpack.c.h.b16 %v227
    %v489 = vunpack.c.l.b16 %v228
    %v490 = vunpack.c.h.b16 %v228
    %v491 = vunpack.c.l.b16 %v229
    %v492 = vunpack.c.h.b16 %v229
    %v493 = vunpack.c.l.b16 %v230
    %v494 = vunpack.c.h.b16 %v230
    %v495 = vunpack.c.l.b16 %v231
    %v496 = vunpack.c.h.b16 %v231
    %v497 = vunpack.c.l.b16 %v232
    %v498 = vunpack.c.h.b16 %v232
    %v499 = vunpack.c.l.b16 %v233
    %v500 = vunpack.c.h.b16 %v233
    %v501 = vunpack.c.l.b16 %v234
    %v502 = vunpack.c.h.b16 %v234
    %v503 = vunpack.c.l.b16 %v235
    %v504 = vunpack.c.h.b16 %v235
    %v505 = vunpack.c.l.b16 %v236
    %v506 = vunpack.c.h.b16 %v236
    %v507 = vpack.c.b16 %v349, %v347
    %v508 = vpack.c.b16 %v350, %v348
    %v509 = vpack.c.b16 %v353, %v351
    %v510 = vpack.c.b16 %v354, %v352
    %v511 = vpack.c.b16 %v357, %v355
    %v512 = vpack.c.b16 %v358, %v356
    %v513 = vpack.c.b16 %v361, %v359
    %v514 = vpack.c.b16 %v362, %v360
    %v515 = vpack.c.b16 %v365, %v363
    %v516 = vpack.c.b16 %v366, %v364
    %v517 = vpack.c.b16 %v369, %v367
    %v518 = vpack.c.b16 %v370, %v368
    %v519 = vpack.c.b16 %v373, %v371
    %v520 = vpack.c.b16 %v374, %v372
    %v521 = vpack.c.b16 %v377, %v375
    %v522 = vpack.c.b16 %v378, %v376
    %v523 = vpack.c.b16 %v381, %v379
    %v524 = vpack.c.b16 %v382, %v380
    %v525 = vpack.c.b16 %v385, %v383
    %v526 = vpack.c.b16 %v386, %v384
    %v527 = vpack.c.b16 %v389, %v387
    %v528 = vpack.c.b16 %v390, %v388
    %v529 = vpack.c.b16 %v393, %v391
    %v530 = vpack.c.b16 %v394, %v392
    %v531 = vpack.c.b16 %v397, %v395
    %v532 = vpack.c.b16 %v398, %v396
    %v533 = vpack.c.b16 %v401, %v399
    %v534 = vpack.c.b16 %v402, %v400
    %v535 = vpack.c.b16 %v405, %v403
    %v536 = vpack.c.b16 %v406, %v404
    %v537 = vpack.c.b16 %v409, %v407
    %v538 = vpack.c.b16 %v410, %v408
    %v539 = vpack.c.b16 %v413, %v411
    %v540 = vpack.c.b16 %v414, %v412
    %v541 = vpack.c.b16 %v417, %v415
    %v542 = vpack.c.b16 %v418, %v416
    %v543 = vpack.c.b16 %v421, %v419
    %v544 = vpack.c.b16 %v422, %v420
    %v545 = vpack.c.b16 %v425, %v423
    %v546 = vpack.c.b16 %v426, %v424
    %v547 = vpack.c.b16 %v429, %v427
    %v548 = vpack.c.b16 %v430, %v428
    %v549 = vpack.c.b16 %v433, %v431
    %v550 = vpack.c.b16 %v434, %v432
    %v551 = vpack.c.b16 %v437, %v435
    %v552 = vpack.c.b16 %v438, %v436
    %v553 = vpack.c.b16 %v441, %v439
    %v554 = vpack.c.b16 %v442, %v440
    %v555 = vpack.c.b16 %v445, %v443
    %v556 = vpack.c.b16 %v446, %v444
    %v557 = vpack.c.b16 %v449, %v447
    %v558 = vpack.c.b16 %v450, %v448
    %v559 = vpack.c.b16 %v453, %v451
    %v560 = vpack.c.b16 %v454, %v452
    %v561 = vpack.c.b16 %v457, %v455
    %v562 = vpack.c.b16 %v458, %v456
    %v563 = vpack.c.b16 %v461, %v459
    %v564 = vpack.c.b16 %v462, %v460
    %v565 = vpack.c.b16 %v465, %v463
    %v566 = vpack.c.b16 %v466, %v464
    %v567 = vpack.c.b16 %v469, %v467
    %v568 = vpack.c.b16 %v470, %v468
    %v569 = vpack.c.b16 %v473, %v471
    %v570 = vpack.c.b16 %v474, %v472
    %v571 = vpack.c.b16 %v477, %v475
    %v572 = vpack.c.b16 %v478, %v476
    %v573 = vpack.c.b16 %v481, %v479
    %v574 = vpack.c.b16 %v482, %v480
    %v575 = vpack.c.b16 %v485, %v483
    %v576 = vpack.c.b16 %v486, %v484
    %v577 = vpack.c.b16 %v489, %v487
    %v578 = vpack.c.b16 %v490, %v488
    %v579 = vpack.c.b16 %v493, %v491
    %v580 = vpack.c.b16 %v494, %v492
    %v581 = vpack.c.b16 %v497, %v495
    %v582 = vpack.c.b16 %v498, %v496
    %v583 = vpack.c.b16 %v501, %v499
    %v584 = vpack.c.b16 %v502, %v500
    %v585 = vpack.c.b16 %v505, %v503
    %v586 = vpack.c.b16 %v506, %v504
    %667 = vmatprep.subr.bf16.mxu0 %v522
    %668 = vmatpush1.bf16.msra.mxu0 %v521
    %669 = vmatprep.subr.bf16.mxu0 %v520
    %670 = vmatpush1.bf16.msra.mxu0 %v519
    %671 = vmatprep.subr.bf16.mxu0 %v518
    %672 = vmatpush1.bf16.msra.mxu0 %v517
    %673 = vmatprep.subr.bf16.mxu0 %v516
    %674 = vmatpush1.bf16.msra.mxu0 %v515
    %675 = vmatprep.subr.bf16.mxu0 %v514
    %676 = vmatpush1.bf16.msra.mxu0 %v513
    %677 = vmatprep.subr.bf16.mxu0 %v512
    %678 = vmatpush1.bf16.msra.mxu0 %v511
    %679 = vmatprep.subr.bf16.mxu0 %v510
    %680 = vmatpush1.bf16.msra.mxu0 %v509
    %681 = vmatprep.subr.bf16.mxu0 %v508
    %682 = vmatpush1.bf16.msra.mxu0 %v507
    %683 = vmatprep.subr.bf16.mxu0 %v538
    %684 = vmatpush2.bf16.msra.mxu0 %v537
    %685 = vmatprep.subr.bf16.mxu0 %v536
    %686 = vmatpush2.bf16.msra.mxu0 %v535
    %687 = vmatprep.subr.bf16.mxu0 %v534
    %688 = vmatpush2.bf16.msra.mxu0 %v533
    %689 = vmatprep.subr.bf16.mxu0 %v532
    %690 = vmatpush2.bf16.msra.mxu0 %v531
    %691 = vmatprep.subr.bf16.mxu0 %v530
    %692 = vmatpush2.bf16.msra.mxu0 %v529
    %693 = vmatprep.subr.bf16.mxu0 %v528
    %694 = vmatpush2.bf16.msra.mxu0 %v527
    %695 = vmatprep.subr.bf16.mxu0 %v526
    %696 = vmatpush2.bf16.msra.mxu0 %v525
    %697 = vmatprep.subr.bf16.mxu0 %v524
    %698 = vmatpush2.bf16.msra.mxu0 %v523
    %699 = vmatprep.mubr.bf16.mxu0 %v258
    %700 = vmatmul.mubr.bf16.gmra.mxu0 %v257
    %v701 = vpop.f32.mrf.mxu0
    %v702 = vadd.f32 %v242, %v701
    %v703 = vpop.f32.mrf.mxu0
    %v704 = vadd.f32 %v246, %v703
    %v705 = vpop.f32.mrf.mxu0
    %v706 = vpop.f32.mrf.mxu0
    %707 = vdwg.mxu0
    %708 = vmatprep.subr.bf16.mxu0 %v554
    %709 = vmatpush1.bf16.msra.mxu0 %v553
    %710 = vmatprep.subr.bf16.mxu0 %v552
    %711 = vmatpush1.bf16.msra.mxu0 %v551
    %712 = vmatprep.subr.bf16.mxu0 %v550
    %713 = vmatpush1.bf16.msra.mxu0 %v549
    %714 = vmatprep.subr.bf16.mxu0 %v548
    %715 = vmatpush1.bf16.msra.mxu0 %v547
    %716 = vmatprep.subr.bf16.mxu0 %v546
    %717 = vmatpush1.bf16.msra.mxu0 %v545
    %718 = vmatprep.subr.bf16.mxu0 %v544
    %719 = vmatpush1.bf16.msra.mxu0 %v543
    %720 = vmatprep.subr.bf16.mxu0 %v542
    %721 = vmatpush1.bf16.msra.mxu0 %v541
    %722 = vmatprep.subr.bf16.mxu0 %v540
    %723 = vmatpush1.bf16.msra.mxu0 %v539
    %724 = vmatprep.subr.bf16.mxu0 %v570
    %725 = vmatpush2.bf16.msra.mxu0 %v569
    %726 = vmatprep.subr.bf16.mxu0 %v568
    %727 = vmatpush2.bf16.msra.mxu0 %v567
    %728 = vmatprep.subr.bf16.mxu0 %v566
    %729 = vmatpush2.bf16.msra.mxu0 %v565
    %730 = vmatprep.subr.bf16.mxu0 %v564
    %731 = vmatpush2.bf16.msra.mxu0 %v563
    %732 = vmatprep.subr.bf16.mxu0 %v562
    %733 = vmatpush2.bf16.msra.mxu0 %v561
    %734 = vmatprep.subr.bf16.mxu0 %v560
    %735 = vmatpush2.bf16.msra.mxu0 %v559
    %736 = vmatprep.subr.bf16.mxu0 %v558
    %737 = vmatpush2.bf16.msra.mxu0 %v557
    %738 = vmatprep.subr.bf16.mxu0 %v556
    %739 = vmatpush2.bf16.msra.mxu0 %v555
    %740 = vmatprep.mubr.bf16.mxu0 %v260
    %741 = vmatmul.mubr.bf16.gmra.mxu0 %v259
    %v742 = vpop.f32.mrf.mxu0
    %v743 = vadd.f32 %v702, %v742
    %v744 = vpop.f32.mrf.mxu0
    %v745 = vadd.f32 %v704, %v744
    %v746 = vpop.f32.mrf.mxu0
    %v747 = vpop.f32.mrf.mxu0
    %748 = vdwg.mxu0
    %749 = vmatprep.subr.bf16.mxu0 %v586
    %750 = vmatpush1.bf16.msra.mxu0 %v585
    %751 = vmatprep.subr.bf16.mxu0 %v584
    %752 = vmatpush1.bf16.msra.mxu0 %v583
    %753 = vmatprep.subr.bf16.mxu0 %v582
    %754 = vmatpush1.bf16.msra.mxu0 %v581
    %755 = vmatprep.subr.bf16.mxu0 %v580
    %756 = vmatpush1.bf16.msra.mxu0 %v579
    %757 = vmatprep.subr.bf16.mxu0 %v578
    %758 = vmatpush1.bf16.msra.mxu0 %v577
    %759 = vmatprep.subr.bf16.mxu0 %v576
    %760 = vmatpush1.bf16.msra.mxu0 %v575
    %761 = vmatprep.subr.bf16.mxu0 %v574
    %762 = vmatpush1.bf16.msra.mxu0 %v573
    %763 = vmatprep.subr.bf16.mxu0 %v572
    %764 = vmatpush1.bf16.msra.mxu0 %v571
    %765 = vmatprep.subr.bf16.mxu0 0
    %766 = vmatpush2.bf16.msra.mxu0 0
    %767 = vmatprep.subr.bf16.mxu0 0
    %768 = vmatpush2.bf16.msra.mxu0 0
    %769 = vmatprep.subr.bf16.mxu0 0
    %770 = vmatpush2.bf16.msra.mxu0 0
    %771 = vmatprep.subr.bf16.mxu0 0
    %772 = vmatpush2.bf16.msra.mxu0 0
    %773 = vmatprep.subr.bf16.mxu0 0
    %774 = vmatpush2.bf16.msra.mxu0 0
    %775 = vmatprep.subr.bf16.mxu0 0
    %776 = vmatpush2.bf16.msra.mxu0 0
    %777 = vmatprep.subr.bf16.mxu0 0
    %778 = vmatpush2.bf16.msra.mxu0 0
    %779 = vmatprep.subr.bf16.mxu0 0
    %780 = vmatpush2.bf16.msra.mxu0 0
    %781 = vmatprep.mubr.bf16.mxu0 0
    %782 = vmatmul.mubr.bf16.gmra.mxu0 %v261
    %v783 = vpop.f32.mrf.mxu0
    %v784 = vadd.f32 %v743, %v783
    %v785 = vpop.f32.mrf.mxu0
    %v786 = vadd.f32 %v745, %v785
    %v787 = vpop.f32.mrf.mxu0
    %v788 = vpop.f32.mrf.mxu0
    %789 = vdwg.mxu0
    %v790 = vtanh.pop %v784
    %v791 = vtanh.pop %v786
    %v792 = vpack.c.bf16 %v790, %v790
    %v793 = vpack.c.bf16 %v791, %v791
    %v794 = vld [vmem:[#allocation7] sm:$0xf]
    %v795 = vld [vmem:[#allocation7 + $0x4] sm:$0xf]
    %v796 = vld [vmem:[#allocation7 + $0x8] sm:$0xf]
    %v797 = vld [vmem:[#allocation7 + $0xc] sm:$0xf]
    %v798 = vld [vmem:[#allocation7 + $0x10] sm:$0xf]
    %v799 = vld [vmem:[#allocation7 + $0x14] sm:$0xf]
    %v800 = vld [vmem:[#allocation7 + $0x18] sm:$0xf]
    %v801 = vld [vmem:[#allocation7 + $0x1c] sm:$0xf]
    %v802 = vld [vmem:[#allocation7 + $0x20] sm:$0xf]
    %v803 = vld [vmem:[#allocation7 + $0x24] sm:$0xf]
    %v804 = vld [vmem:[#allocation7 + $0x28] sm:$0xf]
    %v805 = vld [vmem:[#allocation7 + $0x2c] sm:$0xf]
    %v806 = vld [vmem:[#allocation7 + $0x30] sm:$0xf]
    %v807 = vld [vmem:[#allocation7 + $0x34] sm:$0xf]
    %v808 = vld [vmem:[#allocation7 + $0x38] sm:$0xf]
    %v809 = vld [vmem:[#allocation7 + $0x3c] sm:$0xf]
    %v810 = vld [vmem:[#allocation7 + $0x40] sm:$0xf]
    %v811 = vld [vmem:[#allocation7 + $0x44] sm:$0xf]
    %v812 = vld [vmem:[#allocation7 + $0x48] sm:$0xf]
    %v813 = vld [vmem:[#allocation7 + $0x4c] sm:$0xf]
    %v814 = vld [vmem:[#allocation7 + $0x50] sm:$0xf]
    %v815 = vld [vmem:[#allocation7 + $0x54] sm:$0xf]
    %v816 = vld [vmem:[#allocation7 + $0x58] sm:$0xf]
    %v817 = vld [vmem:[#allocation7 + $0x5c] sm:$0xf]
    %v818 = vld [vmem:[#allocation7 + $0x60] sm:$0xf]
    %v819 = vld [vmem:[#allocation7 + $0x64] sm:$0xf]
    %v820 = vld [vmem:[#allocation7 + $0x68] sm:$0xf]
    %v821 = vld [vmem:[#allocation7 + $0x6c] sm:$0xf]
    %v822 = vld [vmem:[#allocation7 + $0x70] sm:$0xf]
    %v823 = vld [vmem:[#allocation7 + $0x74] sm:$0xf]
    %v824 = vld [vmem:[#allocation7 + $0x78] sm:$0xf]
    %v825 = vld [vmem:[#allocation7 + $0x7c] sm:$0xf]
    %v826 = vld [vmem:[#allocation8] sm:$0x1]
    %v828 = vlaneseq
    %v829 = vshrl.u32 %v828, 7
    %v830 = vsub.s32 0, %v829
    %v831 = vrot.slane %v826, %v830
    %v865 = vunpack.c.l.b16 %v794
    %v866 = vunpack.c.l.b16 %v795
    %v867 = vunpack.c.l.b16 %v796
    %v868 = vunpack.c.l.b16 %v797
    %v869 = vunpack.c.l.b16 %v798
    %v870 = vunpack.c.l.b16 %v799
    %v871 = vunpack.c.l.b16 %v800
    %v872 = vunpack.c.l.b16 %v801
    %v873 = vunpack.c.l.b16 %v802
    %v874 = vunpack.c.l.b16 %v803
    %v875 = vunpack.c.l.b16 %v804
    %v876 = vunpack.c.l.b16 %v805
    %v877 = vunpack.c.l.b16 %v806
    %v878 = vunpack.c.l.b16 %v807
    %v879 = vunpack.c.l.b16 %v808
    %v880 = vunpack.c.l.b16 %v809
    %v881 = vunpack.c.l.b16 %v810
    %v882 = vunpack.c.l.b16 %v811
    %v883 = vunpack.c.l.b16 %v812
    %v884 = vunpack.c.l.b16 %v813
    %v885 = vunpack.c.l.b16 %v814
    %v886 = vunpack.c.l.b16 %v815
    %v887 = vunpack.c.l.b16 %v816
    %v888 = vunpack.c.l.b16 %v817
    %v889 = vunpack.c.l.b16 %v818
    %v890 = vunpack.c.l.b16 %v819
    %v891 = vunpack.c.l.b16 %v820
    %v892 = vunpack.c.l.b16 %v821
    %v893 = vunpack.c.l.b16 %v822
    %v894 = vunpack.c.l.b16 %v823
    %v895 = vunpack.c.l.b16 %v824
    %v896 = vunpack.c.l.b16 %v825
    %v897 = vpack.c.b16 %v866, %v865
    %v898 = vpack.c.b16 %v868, %v867
    %v899 = vpack.c.b16 %v870, %v869
    %v900 = vpack.c.b16 %v872, %v871
    %v901 = vpack.c.b16 %v874, %v873
    %v902 = vpack.c.b16 %v876, %v875
    %v903 = vpack.c.b16 %v878, %v877
    %v904 = vpack.c.b16 %v880, %v879
    %v905 = vpack.c.b16 %v882, %v881
    %v906 = vpack.c.b16 %v884, %v883
    %v907 = vpack.c.b16 %v886, %v885
    %v908 = vpack.c.b16 %v888, %v887
    %v909 = vpack.c.b16 %v890, %v889
    %v910 = vpack.c.b16 %v892, %v891
    %v911 = vpack.c.b16 %v894, %v893
    %v912 = vpack.c.b16 %v896, %v895
    %929 = vmatprep.subr.bf16.mxu0 0
    %930 = vmatpush1.bf16.msra.mxu0 %v904
    %931 = vmatprep.subr.bf16.mxu0 0
    %932 = vmatpush1.bf16.msra.mxu0 %v903
    %933 = vmatprep.subr.bf16.mxu0 0
    %934 = vmatpush1.bf16.msra.mxu0 %v902
    %935 = vmatprep.subr.bf16.mxu0 0
    %936 = vmatpush1.bf16.msra.mxu0 %v901
    %937 = vmatprep.subr.bf16.mxu0 0
    %938 = vmatpush1.bf16.msra.mxu0 %v900
    %939 = vmatprep.subr.bf16.mxu0 0
    %940 = vmatpush1.bf16.msra.mxu0 %v899
    %941 = vmatprep.subr.bf16.mxu0 0
    %942 = vmatpush1.bf16.msra.mxu0 %v898
    %943 = vmatprep.subr.bf16.mxu0 0
    %944 = vmatpush1.bf16.msra.mxu0 %v897
    %945 = vmatprep.subr.bf16.mxu0 0
    %946 = vmatpush2.bf16.msra.mxu0 %v912
    %947 = vmatprep.subr.bf16.mxu0 0
    %948 = vmatpush2.bf16.msra.mxu0 %v911
    %949 = vmatprep.subr.bf16.mxu0 0
    %950 = vmatpush2.bf16.msra.mxu0 %v910
    %951 = vmatprep.subr.bf16.mxu0 0
    %952 = vmatpush2.bf16.msra.mxu0 %v909
    %953 = vmatprep.subr.bf16.mxu0 0
    %954 = vmatpush2.bf16.msra.mxu0 %v908
    %955 = vmatprep.subr.bf16.mxu0 0
    %956 = vmatpush2.bf16.msra.mxu0 %v907
    %957 = vmatprep.subr.bf16.mxu0 0
    %958 = vmatpush2.bf16.msra.mxu0 %v906
    %959 = vmatprep.subr.bf16.mxu0 0
    %960 = vmatpush2.bf16.msra.mxu0 %v905
    %961 = vmatprep.mubr.bf16.mxu0 %v793
    %962 = vmatmul.mubr.bf16.gmra.mxu0 %v792
    %v963 = vpop.f32.mrf.mxu0
    %v964 = vadd.f32 %v831, %v963
    %v965 = vpop.f32.mrf.mxu0
    %v966 = vpop.f32.mrf.mxu0
    %v967 = vpop.f32.mrf.mxu0
    %968 = vdwg.mxu0
    %v969 = vtanh.pop %v964
    %v970 = vpack.c.bf16 %v969, %v969
    %v971 = vld [vmem:[#allocation10] sm:$0xf]
    %v972 = vld [vmem:[#allocation10 + $0x4] sm:$0xf]
    %v973 = vld [vmem:[#allocation10 + $0x8] sm:$0xf]
    %v974 = vld [vmem:[#allocation10 + $0xc] sm:$0xf]
    %v975 = vld [vmem:[#allocation10 + $0x10] sm:$0xf]
    %v976 = vld [vmem:[#allocation10 + $0x14] sm:$0xf]
    %v977 = vld [vmem:[#allocation10 + $0x18] sm:$0xf]
    %v978 = vld [vmem:[#allocation10 + $0x1c] sm:$0xf]
    %v979 = vld [vmem:[#allocation10 + $0x20] sm:$0xf]
    %v980 = vld [vmem:[#allocation10 + $0x24] sm:$0xf]
    %v981 = vld [vmem:[#allocation10 + $0x28] sm:$0xf]
    %v982 = vld [vmem:[#allocation10 + $0x2c] sm:$0xf]
    %v983 = vld [vmem:[#allocation10 + $0x30] sm:$0xf]
    %v984 = vld [vmem:[#allocation10 + $0x34] sm:$0xf]
    %v985 = vld [vmem:[#allocation10 + $0x38] sm:$0xf]
    %v986 = vld [vmem:[#allocation10 + $0x3c] sm:$0xf]
    %v987 = vld [vmem:[%s6] sm:$0x1]
    %v989 = vlaneseq
    %v990 = vshrl.u32 %v989, 7
    %v991 = vsub.s32 0, %v990
    %v992 = vrot.slane %v987, %v991
    %v1010 = vunpack.c.l.b16 %v971
    %v1011 = vunpack.c.l.b16 %v972
    %v1012 = vunpack.c.l.b16 %v973
    %v1013 = vunpack.c.l.b16 %v974
    %v1014 = vunpack.c.l.b16 %v975
    %v1015 = vunpack.c.l.b16 %v976
    %v1016 = vunpack.c.l.b16 %v977
    %v1017 = vunpack.c.l.b16 %v978
    %v1018 = vunpack.c.l.b16 %v979
    %v1019 = vunpack.c.l.b16 %v980
    %v1020 = vunpack.c.l.b16 %v981
    %v1021 = vunpack.c.l.b16 %v982
    %v1022 = vunpack.c.l.b16 %v983
    %v1023 = vunpack.c.l.b16 %v984
    %v1024 = vunpack.c.l.b16 %v985
    %v1025 = vunpack.c.l.b16 %v986
    %v1026 = vpack.c.b16 %v1011, %v1010
    %v1027 = vpack.c.b16 %v1013, %v1012
    %v1028 = vpack.c.b16 %v1015, %v1014
    %v1029 = vpack.c.b16 %v1017, %v1016
    %v1030 = vpack.c.b16 %v1019, %v1018
    %v1031 = vpack.c.b16 %v1021, %v1020
    %v1032 = vpack.c.b16 %v1023, %v1022
    %v1033 = vpack.c.b16 %v1025, %v1024
    %1042 = vmatprep.subr.bf16.mxu0 0
    %1043 = vmatpush1.bf16.msra.mxu0 %v1033
    %1044 = vmatprep.subr.bf16.mxu0 0
    %1045 = vmatpush1.bf16.msra.mxu0 %v1032
    %1046 = vmatprep.subr.bf16.mxu0 0
    %1047 = vmatpush1.bf16.msra.mxu0 %v1031
    %1048 = vmatprep.subr.bf16.mxu0 0
    %1049 = vmatpush1.bf16.msra.mxu0 %v1030
    %1050 = vmatprep.subr.bf16.mxu0 0
    %1051 = vmatpush1.bf16.msra.mxu0 %v1029
    %1052 = vmatprep.subr.bf16.mxu0 0
    %1053 = vmatpush1.bf16.msra.mxu0 %v1028
    %1054 = vmatprep.subr.bf16.mxu0 0
    %1055 = vmatpush1.bf16.msra.mxu0 %v1027
    %1056 = vmatprep.subr.bf16.mxu0 0
    %1057 = vmatpush1.bf16.msra.mxu0 %v1026
    %1058 = vmatprep.subr.bf16.mxu0 0
    %1059 = vmatpush2.bf16.msra.mxu0 0
    %1060 = vmatprep.subr.bf16.mxu0 0
    %1061 = vmatpush2.bf16.msra.mxu0 0
    %1062 = vmatprep.subr.bf16.mxu0 0
    %1063 = vmatpush2.bf16.msra.mxu0 0
    %1064 = vmatprep.subr.bf16.mxu0 0
    %1065 = vmatpush2.bf16.msra.mxu0 0
    %1066 = vmatprep.subr.bf16.mxu0 0
    %1067 = vmatpush2.bf16.msra.mxu0 0
    %1068 = vmatprep.subr.bf16.mxu0 0
    %1069 = vmatpush2.bf16.msra.mxu0 0
    %1070 = vmatprep.subr.bf16.mxu0 0
    %1071 = vmatpush2.bf16.msra.mxu0 0
    %1072 = vmatprep.subr.bf16.mxu0 0
    %1073 = vmatpush2.bf16.msra.mxu0 0
    %1074 = vmatprep.mubr.bf16.mxu0 0
    %1075 = vmatmul.mubr.bf16.gmra.mxu0 %v970
    %v1076 = vpop.f32.mrf.mxu0
    %v1077 = vadd.f32 %v992, %v1076
    %v1078 = vpop.f32.mrf.mxu0
    %v1079 = vpop.f32.mrf.mxu0
    %v1080 = vpop.f32.mrf.mxu0
    %1081 = vdwg.mxu0
    %1082 = vst [vmem:[#allocation16] sm:$0xff] %v1077
    %v1083 = vpack.c.bf16 %v1077, %v1077
    %v1084 = vld [vmem:[#allocation11] sm:$0xf]
    %v1085 = vld [vmem:[#allocation11 + $0x4] sm:$0xf]
    %v1086 = vld [vmem:[#allocation11 + $0x8] sm:$0xf]
    %v1087 = vld [vmem:[#allocation11 + $0xc] sm:$0xf]
    %v1088 = vld [vmem:[#allocation11 + $0x10] sm:$0xf]
    %v1089 = vld [vmem:[#allocation11 + $0x14] sm:$0xf]
    %v1090 = vld [vmem:[#allocation11 + $0x18] sm:$0xf]
    %v1091 = vld [vmem:[#allocation11 + $0x1c] sm:$0xf]
    %v1092 = vld [vmem:[#allocation11 + $0x20] sm:$0xf]
    %v1093 = vld [vmem:[#allocation11 + $0x24] sm:$0xf]
    %v1094 = vld [vmem:[#allocation11 + $0x28] sm:$0xf]
    %v1095 = vld [vmem:[#allocation11 + $0x2c] sm:$0xf]
    %v1096 = vld [vmem:[#allocation11 + $0x30] sm:$0xf]
    %v1097 = vld [vmem:[#allocation11 + $0x34] sm:$0xf]
    %v1098 = vld [vmem:[#allocation11 + $0x38] sm:$0xf]
    %v1099 = vld [vmem:[#allocation11 + $0x3c] sm:$0xf]
    %v1100 = vld [vmem:[%s8] sm:$0x1]
    %v1102 = vlaneseq
    %v1103 = vshrl.u32 %v1102, 7
    %v1104 = vsub.s32 0, %v1103
    %v1105 = vrot.slane %v1100, %v1104
    %v1123 = vunpack.c.l.b16 %v1084
    %v1124 = vunpack.c.l.b16 %v1085
    %v1125 = vunpack.c.l.b16 %v1086
    %v1126 = vunpack.c.l.b16 %v1087
    %v1127 = vunpack.c.l.b16 %v1088
    %v1128 = vunpack.c.l.b16 %v1089
    %v1129 = vunpack.c.l.b16 %v1090
    %v1130 = vunpack.c.l.b16 %v1091
    %v1131 = vunpack.c.l.b16 %v1092
    %v1132 = vunpack.c.l.b16 %v1093
    %v1133 = vunpack.c.l.b16 %v1094
    %v1134 = vunpack.c.l.b16 %v1095
    %v1135 = vunpack.c.l.b16 %v1096
    %v1136 = vunpack.c.l.b16 %v1097
    %v1137 = vunpack.c.l.b16 %v1098
    %v1138 = vunpack.c.l.b16 %v1099
    %v1139 = vpack.c.b16 %v1124, %v1123
    %v1140 = vpack.c.b16 %v1126, %v1125
    %v1141 = vpack.c.b16 %v1128, %v1127
    %v1142 = vpack.c.b16 %v1130, %v1129
    %v1143 = vpack.c.b16 %v1132, %v1131
    %v1144 = vpack.c.b16 %v1134, %v1133
    %v1145 = vpack.c.b16 %v1136, %v1135
    %v1146 = vpack.c.b16 %v1138, %v1137
    %1155 = vmatprep.subr.bf16.mxu0 0
    %1156 = vmatpush1.bf16.msra.mxu0 %v1146
    %1157 = vmatprep.subr.bf16.mxu0 0
    %1158 = vmatpush1.bf16.msra.mxu0 %v1145
    %1159 = vmatprep.subr.bf16.mxu0 0
    %1160 = vmatpush1.bf16.msra.mxu0 %v1144
    %1161 = vmatprep.subr.bf16.mxu0 0
    %1162 = vmatpush1.bf16.msra.mxu0 %v1143
    %1163 = vmatprep.subr.bf16.mxu0 0
    %1164 = vmatpush1.bf16.msra.mxu0 %v1142
    %1165 = vmatprep.subr.bf16.mxu0 0
    %1166 = vmatpush1.bf16.msra.mxu0 %v1141
    %1167 = vmatprep.subr.bf16.mxu0 0
    %1168 = vmatpush1.bf16.msra.mxu0 %v1140
    %1169 = vmatprep.subr.bf16.mxu0 0
    %1170 = vmatpush1.bf16.msra.mxu0 %v1139
    %1171 = vmatprep.subr.bf16.mxu0 0
    %1172 = vmatpush2.bf16.msra.mxu0 0
    %1173 = vmatprep.subr.bf16.mxu0 0
    %1174 = vmatpush2.bf16.msra.mxu0 0
    %1175 = vmatprep.subr.bf16.mxu0 0
    %1176 = vmatpush2.bf16.msra.mxu0 0
    %1177 = vmatprep.subr.bf16.mxu0 0
    %1178 = vmatpush2.bf16.msra.mxu0 0
    %1179 = vmatprep.subr.bf16.mxu0 0
    %1180 = vmatpush2.bf16.msra.mxu0 0
    %1181 = vmatprep.subr.bf16.mxu0 0
    %1182 = vmatpush2.bf16.msra.mxu0 0
    %1183 = vmatprep.subr.bf16.mxu0 0
    %1184 = vmatpush2.bf16.msra.mxu0 0
    %1185 = vmatprep.subr.bf16.mxu0 0
    %1186 = vmatpush2.bf16.msra.mxu0 0
    %1187 = vmatprep.mubr.bf16.mxu0 0
    %1188 = vmatmul.mubr.bf16.gmra.mxu0 %v1083
    %v1189 = vpop.f32.mrf.mxu0
    %v1190 = vadd.f32 %v1105, %v1189
    %v1191 = vpop.f32.mrf.mxu0
    %v1192 = vpop.f32.mrf.mxu0
    %v1193 = vpop.f32.mrf.mxu0
    %1194 = vdwg.mxu0
    %v1195 = vtanh.pop %v1190
    %v1196 = vpack.c.bf16 %v1195, %v1195
    %v1197 = vld [vmem:[#allocation13] sm:$0xff]
    %v1198 = vld [vmem:[#allocation13 + $0x8] sm:$0xff]
    %v1199 = vld [vmem:[#allocation13 + $0x10] sm:$0xff]
    %v1200 = vld [vmem:[#allocation13 + $0x18] sm:$0xff]
    %v1201 = vld [vmem:[#allocation13 + $0x20] sm:$0xff]
    %v1202 = vld [vmem:[#allocation13 + $0x28] sm:$0xff]
    %v1203 = vld [vmem:[#allocation13 + $0x30] sm:$0xff]
    %v1204 = vld [vmem:[#allocation13 + $0x38] sm:$0xff]
    %v1205 = vld [vmem:[#allocation13 + $0x40] sm:$0xff]
    %v1206 = vld [vmem:[#allocation13 + $0x48] sm:$0xff]
    %v1207 = vld [vmem:[#allocation13 + $0x50] sm:$0xff]
    %v1208 = vld [vmem:[#allocation13 + $0x58] sm:$0xff]
    %v1209 = vld [vmem:[#allocation13 + $0x60] sm:$0xff]
    %v1210 = vld [vmem:[#allocation13 + $0x68] sm:$0xff]
    %v1211 = vld [vmem:[#allocation13 + $0x70] sm:$0xff]
    %v1212 = vld [vmem:[#allocation13 + $0x78] sm:$0xff]
    %v1213 = vld [vmem:[%s10] sm:$0x3]
    %v1215 = vlaneseq
    %v1216 = vshrl.u32 %v1215, 7
    %v1217 = vsub.s32 0, %v1216
    %v1218 = vrot.slane %v1213, %v1217
    %v1219 = vlaneseq
    %v1220 = vshrl.u32 %v1219, 7
    %v1221 = vsub.s32 1, %v1220
    %v1222 = vrot.slane %v1213, %v1221
    %v1241 = vunpack.c.l.b16 %v1197
    %v1242 = vunpack.c.h.b16 %v1197
    %v1243 = vunpack.c.l.b16 %v1198
    %v1244 = vunpack.c.h.b16 %v1198
    %v1245 = vunpack.c.l.b16 %v1199
    %v1246 = vunpack.c.h.b16 %v1199
    %v1247 = vunpack.c.l.b16 %v1200
    %v1248 = vunpack.c.h.b16 %v1200
    %v1249 = vunpack.c.l.b16 %v1201
    %v1250 = vunpack.c.h.b16 %v1201
    %v1251 = vunpack.c.l.b16 %v1202
    %v1252 = vunpack.c.h.b16 %v1202
    %v1253 = vunpack.c.l.b16 %v1203
    %v1254 = vunpack.c.h.b16 %v1203
    %v1255 = vunpack.c.l.b16 %v1204
    %v1256 = vunpack.c.h.b16 %v1204
    %v1257 = vunpack.c.l.b16 %v1205
    %v1258 = vunpack.c.h.b16 %v1205
    %v1259 = vunpack.c.l.b16 %v1206
    %v1260 = vunpack.c.h.b16 %v1206
    %v1261 = vunpack.c.l.b16 %v1207
    %v1262 = vunpack.c.h.b16 %v1207
    %v1263 = vunpack.c.l.b16 %v1208
    %v1264 = vunpack.c.h.b16 %v1208
    %v1265 = vunpack.c.l.b16 %v1209
    %v1266 = vunpack.c.h.b16 %v1209
    %v1267 = vunpack.c.l.b16 %v1210
    %v1268 = vunpack.c.h.b16 %v1210
    %v1269 = vunpack.c.l.b16 %v1211
    %v1270 = vunpack.c.h.b16 %v1211
    %v1271 = vunpack.c.l.b16 %v1212
    %v1272 = vunpack.c.h.b16 %v1212
    %v1273 = vpack.c.b16 %v1243, %v1241
    %v1274 = vpack.c.b16 %v1244, %v1242
    %v1275 = vpack.c.b16 %v1247, %v1245
    %v1276 = vpack.c.b16 %v1248, %v1246
    %v1277 = vpack.c.b16 %v1251, %v1249
    %v1278 = vpack.c.b16 %v1252, %v1250
    %v1279 = vpack.c.b16 %v1255, %v1253
    %v1280 = vpack.c.b16 %v1256, %v1254
    %v1281 = vpack.c.b16 %v1259, %v1257
    %v1282 = vpack.c.b16 %v1260, %v1258
    %v1283 = vpack.c.b16 %v1263, %v1261
    %v1284 = vpack.c.b16 %v1264, %v1262
    %v1285 = vpack.c.b16 %v1267, %v1265
    %v1286 = vpack.c.b16 %v1268, %v1266
    %v1287 = vpack.c.b16 %v1271, %v1269
    %v1288 = vpack.c.b16 %v1272, %v1270
    %1305 = vmatprep.subr.bf16.mxu0 %v1288
    %1306 = vmatpush1.bf16.msra.mxu0 %v1287
    %1307 = vmatprep.subr.bf16.mxu0 %v1286
    %1308 = vmatpush1.bf16.msra.mxu0 %v1285
    %1309 = vmatprep.subr.bf16.mxu0 %v1284
    %1310 = vmatpush1.bf16.msra.mxu0 %v1283
    %1311 = vmatprep.subr.bf16.mxu0 %v1282
    %1312 = vmatpush1.bf16.msra.mxu0 %v1281
    %1313 = vmatprep.subr.bf16.mxu0 %v1280
    %1314 = vmatpush1.bf16.msra.mxu0 %v1279
    %1315 = vmatprep.subr.bf16.mxu0 %v1278
    %1316 = vmatpush1.bf16.msra.mxu0 %v1277
    %1317 = vmatprep.subr.bf16.mxu0 %v1276
    %1318 = vmatpush1.bf16.msra.mxu0 %v1275
    %1319 = vmatprep.subr.bf16.mxu0 %v1274
    %1320 = vmatpush1.bf16.msra.mxu0 %v1273
    %1321 = vmatprep.subr.bf16.mxu0 0
    %1322 = vmatpush2.bf16.msra.mxu0 0
    %1323 = vmatprep.subr.bf16.mxu0 0
    %1324 = vmatpush2.bf16.msra.mxu0 0
    %1325 = vmatprep.subr.bf16.mxu0 0
    %1326 = vmatpush2.bf16.msra.mxu0 0
    %1327 = vmatprep.subr.bf16.mxu0 0
    %1328 = vmatpush2.bf16.msra.mxu0 0
    %1329 = vmatprep.subr.bf16.mxu0 0
    %1330 = vmatpush2.bf16.msra.mxu0 0
    %1331 = vmatprep.subr.bf16.mxu0 0
    %1332 = vmatpush2.bf16.msra.mxu0 0
    %1333 = vmatprep.subr.bf16.mxu0 0
    %1334 = vmatpush2.bf16.msra.mxu0 0
    %1335 = vmatprep.subr.bf16.mxu0 0
    %1336 = vmatpush2.bf16.msra.mxu0 0
    %1337 = vmatprep.mubr.bf16.mxu0 0
    %1338 = vmatmul.mubr.bf16.gmra.mxu0 %v1196
    %v1339 = vpop.f32.mrf.mxu0
    %v1340 = vadd.f32 %v1218, %v1339
    %v1341 = vpop.f32.mrf.mxu0
    %v1342 = vadd.f32 %v1222, %v1341
    %v1343 = vpop.f32.mrf.mxu0
    %v1344 = vpop.f32.mrf.mxu0
    %1345 = vdwg.mxu0
    %v1346 = vtanh.pop %v1340
    %v1347 = vtanh.pop %v1342
    %v1348 = vpack.c.bf16 %v1346, %v1346
    %v1349 = vpack.c.bf16 %v1347, %v1347
    %v1350 = vld [vmem:[#allocation14] sm:$0xff]
    %v1351 = vld [vmem:[#allocation14 + $0x8] sm:$0xff]
    %v1352 = vld [vmem:[#allocation14 + $0x10] sm:$0xf]
    %v1353 = vld [vmem:[#allocation14 + $0x14] sm:$0xff]
    %v1354 = vld [vmem:[#allocation14 + $0x1c] sm:$0xff]
    %v1355 = vld [vmem:[#allocation14 + $0x24] sm:$0xf]
    %v1356 = vld [vmem:[#allocation14 + $0x28] sm:$0xff]
    %v1357 = vld [vmem:[#allocation14 + $0x30] sm:$0xff]
    %v1358 = vld [vmem:[#allocation14 + $0x38] sm:$0xf]
    %v1359 = vld [vmem:[#allocation14 + $0x3c] sm:$0xff]
    %v1360 = vld [vmem:[#allocation14 + $0x44] sm:$0xff]
    %v1361 = vld [vmem:[#allocation14 + $0x4c] sm:$0xf]
    %v1362 = vld [vmem:[#allocation14 + $0x50] sm:$0xff]
    %v1363 = vld [vmem:[#allocation14 + $0x58] sm:$0xff]
    %v1364 = vld [vmem:[#allocation14 + $0x60] sm:$0xf]
    %v1365 = vld [vmem:[#allocation14 + $0x64] sm:$0xff]
    %v1366 = vld [vmem:[#allocation14 + $0x6c] sm:$0xff]
    %v1367 = vld [vmem:[#allocation14 + $0x74] sm:$0xf]
    %v1368 = vld [vmem:[#allocation14 + $0x78] sm:$0xff]
    %v1369 = vld [vmem:[#allocation14 + $0x80] sm:$0xff]
    %v1370 = vld [vmem:[#allocation14 + $0x88] sm:$0xf]
    %v1371 = vld [vmem:[#allocation14 + $0x8c] sm:$0xff]
    %v1372 = vld [vmem:[#allocation14 + $0x94] sm:$0xff]
    %v1373 = vld [vmem:[#allocation14 + $0x9c] sm:$0xf]
    %v1374 = vld [vmem:[#allocation14 + $0xa0] sm:$0xff]
    %v1375 = vld [vmem:[#allocation14 + $0xa8] sm:$0xff]
    %v1376 = vld [vmem:[#allocation14 + $0xb0] sm:$0xf]
    %v1377 = vld [vmem:[#allocation14 + $0xb4] sm:$0xff]
    %v1378 = vld [vmem:[#allocation14 + $0xbc] sm:$0xff]
    %v1379 = vld [vmem:[#allocation14 + $0xc4] sm:$0xf]
    %v1380 = vld [vmem:[#allocation14 + $0xc8] sm:$0xff]
    %v1381 = vld [vmem:[#allocation14 + $0xd0] sm:$0xff]
    %v1382 = vld [vmem:[#allocation14 + $0xd8] sm:$0xf]
    %v1383 = vld [vmem:[#allocation14 + $0xdc] sm:$0xff]
    %v1384 = vld [vmem:[#allocation14 + $0xe4] sm:$0xff]
    %v1385 = vld [vmem:[#allocation14 + $0xec] sm:$0xf]
    %v1386 = vld [vmem:[#allocation14 + $0xf0] sm:$0xff]
    %v1387 = vld [vmem:[#allocation14 + $0xf8] sm:$0xff]
    %v1388 = vld [vmem:[#allocation14 + $0x100] sm:$0xf]
    %v1389 = vld [vmem:[#allocation14 + $0x104] sm:$0xff]
    %v1390 = vld [vmem:[#allocation14 + $0x10c] sm:$0xff]
    %v1391 = vld [vmem:[#allocation14 + $0x114] sm:$0xf]
    %v1392 = vld [vmem:[#allocation14 + $0x118] sm:$0xff]
    %v1393 = vld [vmem:[#allocation14 + $0x120] sm:$0xff]
    %v1394 = vld [vmem:[#allocation14 + $0x128] sm:$0xf]
    %v1395 = vld [vmem:[#allocation14 + $0x12c] sm:$0xff]
    %v1396 = vld [vmem:[#allocation14 + $0x134] sm:$0xff]
    %v1397 = vld [vmem:[#allocation14 + $0x13c] sm:$0xf]
    %v1398 = vld [vmem:[#allocation14 + $0x140] sm:$0xff]
    %v1399 = vld [vmem:[#allocation14 + $0x148] sm:$0xff]
    %v1400 = vld [vmem:[#allocation14 + $0x150] sm:$0xf]
    %v1401 = vld [vmem:[#allocation14 + $0x154] sm:$0xff]
    %v1402 = vld [vmem:[#allocation14 + $0x15c] sm:$0xff]
    %v1403 = vld [vmem:[#allocation14 + $0x164] sm:$0xf]
    %v1404 = vld [vmem:[#allocation14 + $0x168] sm:$0xff]
    %v1405 = vld [vmem:[#allocation14 + $0x170] sm:$0xff]
    %v1406 = vld [vmem:[#allocation14 + $0x178] sm:$0xf]
    %v1407 = vld [vmem:[#allocation14 + $0x17c] sm:$0xff]
    %v1408 = vld [vmem:[#allocation14 + $0x184] sm:$0xff]
    %v1409 = vld [vmem:[#allocation14 + $0x18c] sm:$0xf]
    %v1410 = vld [vmem:[#allocation14 + $0x190] sm:$0xff]
    %v1411 = vld [vmem:[#allocation14 + $0x198] sm:$0xff]
    %v1412 = vld [vmem:[#allocation14 + $0x1a0] sm:$0xf]
    %v1413 = vld [vmem:[#allocation14 + $0x1a4] sm:$0xff]
    %v1414 = vld [vmem:[#allocation14 + $0x1ac] sm:$0xff]
    %v1415 = vld [vmem:[#allocation14 + $0x1b4] sm:$0xf]
    %v1416 = vld [vmem:[#allocation14 + $0x1b8] sm:$0xff]
    %v1417 = vld [vmem:[#allocation14 + $0x1c0] sm:$0xff]
    %v1418 = vld [vmem:[#allocation14 + $0x1c8] sm:$0xf]
    %v1419 = vld [vmem:[#allocation14 + $0x1cc] sm:$0xff]
    %v1420 = vld [vmem:[#allocation14 + $0x1d4] sm:$0xff]
    %v1421 = vld [vmem:[#allocation14 + $0x1dc] sm:$0xf]
    %v1422 = vld [vmem:[#allocation14 + $0x1e0] sm:$0xff]
    %v1423 = vld [vmem:[#allocation14 + $0x1e8] sm:$0xff]
    %v1424 = vld [vmem:[#allocation14 + $0x1f0] sm:$0xf]
    %v1425 = vld [vmem:[#allocation14 + $0x1f4] sm:$0xff]
    %v1426 = vld [vmem:[#allocation14 + $0x1fc] sm:$0xff]
    %v1427 = vld [vmem:[#allocation14 + $0x204] sm:$0xf]
    %v1428 = vld [vmem:[#allocation14 + $0x208] sm:$0xff]
    %v1429 = vld [vmem:[#allocation14 + $0x210] sm:$0xff]
    %v1430 = vld [vmem:[#allocation14 + $0x218] sm:$0xf]
    %v1431 = vld [vmem:[#allocation14 + $0x21c] sm:$0xff]
    %v1432 = vld [vmem:[#allocation14 + $0x224] sm:$0xff]
    %v1433 = vld [vmem:[#allocation14 + $0x22c] sm:$0xf]
    %v1434 = vld [vmem:[#allocation14 + $0x230] sm:$0xff]
    %v1435 = vld [vmem:[#allocation14 + $0x238] sm:$0xff]
    %v1436 = vld [vmem:[#allocation14 + $0x240] sm:$0xf]
    %v1437 = vld [vmem:[#allocation14 + $0x244] sm:$0xff]
    %v1438 = vld [vmem:[#allocation14 + $0x24c] sm:$0xff]
    %v1439 = vld [vmem:[#allocation14 + $0x254] sm:$0xf]
    %v1440 = vld [vmem:[#allocation14 + $0x258] sm:$0xff]
    %v1441 = vld [vmem:[#allocation14 + $0x260] sm:$0xff]
    %v1442 = vld [vmem:[#allocation14 + $0x268] sm:$0xf]
    %v1443 = vld [vmem:[#allocation14 + $0x26c] sm:$0xff]
    %v1444 = vld [vmem:[#allocation14 + $0x274] sm:$0xff]
    %v1445 = vld [vmem:[#allocation14 + $0x27c] sm:$0xf]
    %v1446 = vld [vmem:[%s12] sm:$0x1f]
    %v1448 = vlaneseq
    %v1449 = vshrl.u32 %v1448, 7
    %v1450 = vsub.s32 0, %v1449
    %v1451 = vrot.slane %v1446, %v1450
    %v1452 = vlaneseq
    %v1453 = vshrl.u32 %v1452, 7
    %v1454 = vsub.s32 1, %v1453
    %v1455 = vrot.slane %v1446, %v1454
    %v1456 = vlaneseq
    %v1457 = vshrl.u32 %v1456, 7
    %v1458 = vsub.s32 2, %v1457
    %v1459 = vrot.slane %v1446, %v1458
    %v1460 = vlaneseq
    %v1461 = vshrl.u32 %v1460, 7
    %v1462 = vsub.s32 3, %v1461
    %v1463 = vrot.slane %v1446, %v1462
    %v1464 = vlaneseq
    %v1465 = vshrl.u32 %v1464, 7
    %v1466 = vsub.s32 4, %v1465
    %v1467 = vrot.slane %v1446, %v1466
    %v1569 = vunpack.c.l.b16 %v1350
    %v1570 = vunpack.c.h.b16 %v1350
    %v1571 = vunpack.c.l.b16 %v1351
    %v1572 = vunpack.c.h.b16 %v1351
    %v1573 = vunpack.c.l.b16 %v1352
    %v1574 = vunpack.c.l.b16 %v1353
    %v1575 = vunpack.c.h.b16 %v1353
    %v1576 = vunpack.c.l.b16 %v1354
    %v1577 = vunpack.c.h.b16 %v1354
    %v1578 = vunpack.c.l.b16 %v1355
    %v1579 = vunpack.c.l.b16 %v1356
    %v1580 = vunpack.c.h.b16 %v1356
    %v1581 = vunpack.c.l.b16 %v1357
    %v1582 = vunpack.c.h.b16 %v1357
    %v1583 = vunpack.c.l.b16 %v1358
    %v1584 = vunpack.c.l.b16 %v1359
    %v1585 = vunpack.c.h.b16 %v1359
    %v1586 = vunpack.c.l.b16 %v1360
    %v1587 = vunpack.c.h.b16 %v1360
    %v1588 = vunpack.c.l.b16 %v1361
    %v1589 = vunpack.c.l.b16 %v1362
    %v1590 = vunpack.c.h.b16 %v1362
    %v1591 = vunpack.c.l.b16 %v1363
    %v1592 = vunpack.c.h.b16 %v1363
    %v1593 = vunpack.c.l.b16 %v1364
    %v1594 = vunpack.c.l.b16 %v1365
    %v1595 = vunpack.c.h.b16 %v1365
    %v1596 = vunpack.c.l.b16 %v1366
    %v1597 = vunpack.c.h.b16 %v1366
    %v1598 = vunpack.c.l.b16 %v1367
    %v1599 = vunpack.c.l.b16 %v1368
    %v1600 = vunpack.c.h.b16 %v1368
    %v1601 = vunpack.c.l.b16 %v1369
    %v1602 = vunpack.c.h.b16 %v1369
    %v1603 = vunpack.c.l.b16 %v1370
    %v1604 = vunpack.c.l.b16 %v1371
    %v1605 = vunpack.c.h.b16 %v1371
    %v1606 = vunpack.c.l.b16 %v1372
    %v1607 = vunpack.c.h.b16 %v1372
    %v1608 = vunpack.c.l.b16 %v1373
    %v1609 = vunpack.c.l.b16 %v1374
    %v1610 = vunpack.c.h.b16 %v1374
    %v1611 = vunpack.c.l.b16 %v1375
    %v1612 = vunpack.c.h.b16 %v1375
    %v1613 = vunpack.c.l.b16 %v1376
    %v1614 = vunpack.c.l.b16 %v1377
    %v1615 = vunpack.c.h.b16 %v1377
    %v1616 = vunpack.c.l.b16 %v1378
    %v1617 = vunpack.c.h.b16 %v1378
    %v1618 = vunpack.c.l.b16 %v1379
    %v1619 = vunpack.c.l.b16 %v1380
    %v1620 = vunpack.c.h.b16 %v1380
    %v1621 = vunpack.c.l.b16 %v1381
    %v1622 = vunpack.c.h.b16 %v1381
    %v1623 = vunpack.c.l.b16 %v1382
    %v1624 = vunpack.c.l.b16 %v1383
    %v1625 = vunpack.c.h.b16 %v1383
    %v1626 = vunpack.c.l.b16 %v1384
    %v1627 = vunpack.c.h.b16 %v1384
    %v1628 = vunpack.c.l.b16 %v1385
    %v1629 = vunpack.c.l.b16 %v1386
    %v1630 = vunpack.c.h.b16 %v1386
    %v1631 = vunpack.c.l.b16 %v1387
    %v1632 = vunpack.c.h.b16 %v1387
    %v1633 = vunpack.c.l.b16 %v1388
    %v1634 = vunpack.c.l.b16 %v1389
    %v1635 = vunpack.c.h.b16 %v1389
    %v1636 = vunpack.c.l.b16 %v1390
    %v1637 = vunpack.c.h.b16 %v1390
    %v1638 = vunpack.c.l.b16 %v1391
    %v1639 = vunpack.c.l.b16 %v1392
    %v1640 = vunpack.c.h.b16 %v1392
    %v1641 = vunpack.c.l.b16 %v1393
    %v1642 = vunpack.c.h.b16 %v1393
    %v1643 = vunpack.c.l.b16 %v1394
    %v1644 = vunpack.c.l.b16 %v1395
    %v1645 = vunpack.c.h.b16 %v1395
    %v1646 = vunpack.c.l.b16 %v1396
    %v1647 = vunpack.c.h.b16 %v1396
    %v1648 = vunpack.c.l.b16 %v1397
    %v1649 = vunpack.c.l.b16 %v1398
    %v1650 = vunpack.c.h.b16 %v1398
    %v1651 = vunpack.c.l.b16 %v1399
    %v1652 = vunpack.c.h.b16 %v1399
    %v1653 = vunpack.c.l.b16 %v1400
    %v1654 = vunpack.c.l.b16 %v1401
    %v1655 = vunpack.c.h.b16 %v1401
    %v1656 = vunpack.c.l.b16 %v1402
    %v1657 = vunpack.c.h.b16 %v1402
    %v1658 = vunpack.c.l.b16 %v1403
    %v1659 = vunpack.c.l.b16 %v1404
    %v1660 = vunpack.c.h.b16 %v1404
    %v1661 = vunpack.c.l.b16 %v1405
    %v1662 = vunpack.c.h.b16 %v1405
    %v1663 = vunpack.c.l.b16 %v1406
    %v1664 = vunpack.c.l.b16 %v1407
    %v1665 = vunpack.c.h.b16 %v1407
    %v1666 = vunpack.c.l.b16 %v1408
    %v1667 = vunpack.c.h.b16 %v1408
    %v1668 = vunpack.c.l.b16 %v1409
    %v1669 = vunpack.c.l.b16 %v1410
    %v1670 = vunpack.c.h.b16 %v1410
    %v1671 = vunpack.c.l.b16 %v1411
    %v1672 = vunpack.c.h.b16 %v1411
    %v1673 = vunpack.c.l.b16 %v1412
    %v1674 = vunpack.c.l.b16 %v1413
    %v1675 = vunpack.c.h.b16 %v1413
    %v1676 = vunpack.c.l.b16 %v1414
    %v1677 = vunpack.c.h.b16 %v1414
    %v1678 = vunpack.c.l.b16 %v1415
    %v1679 = vunpack.c.l.b16 %v1416
    %v1680 = vunpack.c.h.b16 %v1416
    %v1681 = vunpack.c.l.b16 %v1417
    %v1682 = vunpack.c.h.b16 %v1417
    %v1683 = vunpack.c.l.b16 %v1418
    %v1684 = vunpack.c.l.b16 %v1419
    %v1685 = vunpack.c.h.b16 %v1419
    %v1686 = vunpack.c.l.b16 %v1420
    %v1687 = vunpack.c.h.b16 %v1420
    %v1688 = vunpack.c.l.b16 %v1421
    %v1689 = vunpack.c.l.b16 %v1422
    %v1690 = vunpack.c.h.b16 %v1422
    %v1691 = vunpack.c.l.b16 %v1423
    %v1692 = vunpack.c.h.b16 %v1423
    %v1693 = vunpack.c.l.b16 %v1424
    %v1694 = vunpack.c.l.b16 %v1425
    %v1695 = vunpack.c.h.b16 %v1425
    %v1696 = vunpack.c.l.b16 %v1426
    %v1697 = vunpack.c.h.b16 %v1426
    %v1698 = vunpack.c.l.b16 %v1427
    %v1699 = vunpack.c.l.b16 %v1428
    %v1700 = vunpack.c.h.b16 %v1428
    %v1701 = vunpack.c.l.b16 %v1429
    %v1702 = vunpack.c.h.b16 %v1429
    %v1703 = vunpack.c.l.b16 %v1430
    %v1704 = vunpack.c.l.b16 %v1431
    %v1705 = vunpack.c.h.b16 %v1431
    %v1706 = vunpack.c.l.b16 %v1432
    %v1707 = vunpack.c.h.b16 %v1432
    %v1708 = vunpack.c.l.b16 %v1433
    %v1709 = vunpack.c.l.b16 %v1434
    %v1710 = vunpack.c.h.b16 %v1434
    %v1711 = vunpack.c.l.b16 %v1435
    %v1712 = vunpack.c.h.b16 %v1435
    %v1713 = vunpack.c.l.b16 %v1436
    %v1714 = vunpack.c.l.b16 %v1437
    %v1715 = vunpack.c.h.b16 %v1437
    %v1716 = vunpack.c.l.b16 %v1438
    %v1717 = vunpack.c.h.b16 %v1438
    %v1718 = vunpack.c.l.b16 %v1439
    %v1719 = vunpack.c.l.b16 %v1440
    %v1720 = vunpack.c.h.b16 %v1440
    %v1721 = vunpack.c.l.b16 %v1441
    %v1722 = vunpack.c.h.b16 %v1441
    %v1723 = vunpack.c.l.b16 %v1442
    %v1724 = vunpack.c.l.b16 %v1443
    %v1725 = vunpack.c.h.b16 %v1443
    %v1726 = vunpack.c.l.b16 %v1444
    %v1727 = vunpack.c.h.b16 %v1444
    %v1728 = vunpack.c.l.b16 %v1445
    %v1729 = vpack.c.b16 %v1574, %v1569
    %v1730 = vpack.c.b16 %v1575, %v1570
    %v1731 = vpack.c.b16 %v1576, %v1571
    %v1732 = vpack.c.b16 %v1577, %v1572
    %v1733 = vpack.c.b16 %v1578, %v1573
    %v1734 = vpack.c.b16 %v1584, %v1579
    %v1735 = vpack.c.b16 %v1585, %v1580
    %v1736 = vpack.c.b16 %v1586, %v1581
    %v1737 = vpack.c.b16 %v1587, %v1582
    %v1738 = vpack.c.b16 %v1588, %v1583
    %v1739 = vpack.c.b16 %v1594, %v1589
    %v1740 = vpack.c.b16 %v1595, %v1590
    %v1741 = vpack.c.b16 %v1596, %v1591
    %v1742 = vpack.c.b16 %v1597, %v1592
    %v1743 = vpack.c.b16 %v1598, %v1593
    %v1744 = vpack.c.b16 %v1604, %v1599
    %v1745 = vpack.c.b16 %v1605, %v1600
    %v1746 = vpack.c.b16 %v1606, %v1601
    %v1747 = vpack.c.b16 %v1607, %v1602
    %v1748 = vpack.c.b16 %v1608, %v1603
    %v1749 = vpack.c.b16 %v1614, %v1609
    %v1750 = vpack.c.b16 %v1615, %v1610
    %v1751 = vpack.c.b16 %v1616, %v1611
    %v1752 = vpack.c.b16 %v1617, %v1612
    %v1753 = vpack.c.b16 %v1618, %v1613
    %v1754 = vpack.c.b16 %v1624, %v1619
    %v1755 = vpack.c.b16 %v1625, %v1620
    %v1756 = vpack.c.b16 %v1626, %v1621
    %v1757 = vpack.c.b16 %v1627, %v1622
    %v1758 = vpack.c.b16 %v1628, %v1623
    %v1759 = vpack.c.b16 %v1634, %v1629
    %v1760 = vpack.c.b16 %v1635, %v1630
    %v1761 = vpack.c.b16 %v1636, %v1631
    %v1762 = vpack.c.b16 %v1637, %v1632
    %v1763 = vpack.c.b16 %v1638, %v1633
    %v1764 = vpack.c.b16 %v1644, %v1639
    %v1765 = vpack.c.b16 %v1645, %v1640
    %v1766 = vpack.c.b16 %v1646, %v1641
    %v1767 = vpack.c.b16 %v1647, %v1642
    %v1768 = vpack.c.b16 %v1648, %v1643
    %v1769 = vpack.c.b16 %v1654, %v1649
    %v1770 = vpack.c.b16 %v1655, %v1650
    %v1771 = vpack.c.b16 %v1656, %v1651
    %v1772 = vpack.c.b16 %v1657, %v1652
    %v1773 = vpack.c.b16 %v1658, %v1653
    %v1774 = vpack.c.b16 %v1664, %v1659
    %v1775 = vpack.c.b16 %v1665, %v1660
    %v1776 = vpack.c.b16 %v1666, %v1661
    %v1777 = vpack.c.b16 %v1667, %v1662
    %v1778 = vpack.c.b16 %v1668, %v1663
    %v1779 = vpack.c.b16 %v1674, %v1669
    %v1780 = vpack.c.b16 %v1675, %v1670
    %v1781 = vpack.c.b16 %v1676, %v1671
    %v1782 = vpack.c.b16 %v1677, %v1672
    %v1783 = vpack.c.b16 %v1678, %v1673
    %v1784 = vpack.c.b16 %v1684, %v1679
    %v1785 = vpack.c.b16 %v1685, %v1680
    %v1786 = vpack.c.b16 %v1686, %v1681
    %v1787 = vpack.c.b16 %v1687, %v1682
    %v1788 = vpack.c.b16 %v1688, %v1683
    %v1789 = vpack.c.b16 %v1694, %v1689
    %v1790 = vpack.c.b16 %v1695, %v1690
    %v1791 = vpack.c.b16 %v1696, %v1691
    %v1792 = vpack.c.b16 %v1697, %v1692
    %v1793 = vpack.c.b16 %v1698, %v1693
    %v1794 = vpack.c.b16 %v1704, %v1699
    %v1795 = vpack.c.b16 %v1705, %v1700
    %v1796 = vpack.c.b16 %v1706, %v1701
    %v1797 = vpack.c.b16 %v1707, %v1702
    %v1798 = vpack.c.b16 %v1708, %v1703
    %v1799 = vpack.c.b16 %v1714, %v1709
    %v1800 = vpack.c.b16 %v1715, %v1710
    %v1801 = vpack.c.b16 %v1716, %v1711
    %v1802 = vpack.c.b16 %v1717, %v1712
    %v1803 = vpack.c.b16 %v1718, %v1713
    %v1804 = vpack.c.b16 %v1724, %v1719
    %v1805 = vpack.c.b16 %v1725, %v1720
    %v1806 = vpack.c.b16 %v1726, %v1721
    %v1807 = vpack.c.b16 %v1727, %v1722
    %v1808 = vpack.c.b16 %v1728, %v1723
    %1889 = vmatprep.subr.bf16.mxu0 %v1765
    %1890 = vmatpush1.bf16.msra.mxu0 %v1764
    %1891 = vmatprep.subr.bf16.mxu0 %v1760
    %1892 = vmatpush1.bf16.msra.mxu0 %v1759
    %1893 = vmatprep.subr.bf16.mxu0 %v1755
    %1894 = vmatpush1.bf16.msra.mxu0 %v1754
    %1895 = vmatprep.subr.bf16.mxu0 %v1750
    %1896 = vmatpush1.bf16.msra.mxu0 %v1749
    %1897 = vmatprep.subr.bf16.mxu0 %v1745
    %1898 = vmatpush1.bf16.msra.mxu0 %v1744
    %1899 = vmatprep.subr.bf16.mxu0 %v1740
    %1900 = vmatpush1.bf16.msra.mxu0 %v1739
    %1901 = vmatprep.subr.bf16.mxu0 %v1735
    %1902 = vmatpush1.bf16.msra.mxu0 %v1734
    %1903 = vmatprep.subr.bf16.mxu0 %v1730
    %1904 = vmatpush1.bf16.msra.mxu0 %v1729
    %1905 = vmatprep.subr.bf16.mxu0 %v1805
    %1906 = vmatpush2.bf16.msra.mxu0 %v1804
    %1907 = vmatprep.subr.bf16.mxu0 %v1800
    %1908 = vmatpush2.bf16.msra.mxu0 %v1799
    %1909 = vmatprep.subr.bf16.mxu0 %v1795
    %1910 = vmatpush2.bf16.msra.mxu0 %v1794
    %1911 = vmatprep.subr.bf16.mxu0 %v1790
    %1912 = vmatpush2.bf16.msra.mxu0 %v1789
    %1913 = vmatprep.subr.bf16.mxu0 %v1785
    %1914 = vmatpush2.bf16.msra.mxu0 %v1784
    %1915 = vmatprep.subr.bf16.mxu0 %v1780
    %1916 = vmatpush2.bf16.msra.mxu0 %v1779
    %1917 = vmatprep.subr.bf16.mxu0 %v1775
    %1918 = vmatpush2.bf16.msra.mxu0 %v1774
    %1919 = vmatprep.subr.bf16.mxu0 %v1770
    %1920 = vmatpush2.bf16.msra.mxu0 %v1769
    %1921 = vmatprep.mubr.bf16.mxu0 %v1349
    %1922 = vmatmul.mubr.bf16.gmra.mxu0 %v1348
    %v1923 = vpop.f32.mrf.mxu0
    %v1924 = vadd.f32 %v1451, %v1923
    %v1925 = vpop.f32.mrf.mxu0
    %v1926 = vadd.f32 %v1455, %v1925
    %v1927 = vpop.f32.mrf.mxu0
    %v1928 = vpop.f32.mrf.mxu0
    %1929 = vdwg.mxu0
    %1930 = vmatprep.subr.bf16.mxu0 %v1767
    %1931 = vmatpush1.bf16.msra.mxu0 %v1766
    %1932 = vmatprep.subr.bf16.mxu0 %v1762
    %1933 = vmatpush1.bf16.msra.mxu0 %v1761
    %1934 = vmatprep.subr.bf16.mxu0 %v1757
    %1935 = vmatpush1.bf16.msra.mxu0 %v1756
    %1936 = vmatprep.subr.bf16.mxu0 %v1752
    %1937 = vmatpush1.bf16.msra.mxu0 %v1751
    %1938 = vmatprep.subr.bf16.mxu0 %v1747
    %1939 = vmatpush1.bf16.msra.mxu0 %v1746
    %1940 = vmatprep.subr.bf16.mxu0 %v1742
    %1941 = vmatpush1.bf16.msra.mxu0 %v1741
    %1942 = vmatprep.subr.bf16.mxu0 %v1737
    %1943 = vmatpush1.bf16.msra.mxu0 %v1736
    %1944 = vmatprep.subr.bf16.mxu0 %v1732
    %1945 = vmatpush1.bf16.msra.mxu0 %v1731
    %1946 = vmatprep.subr.bf16.mxu0 %v1807
    %1947 = vmatpush2.bf16.msra.mxu0 %v1806
    %1948 = vmatprep.subr.bf16.mxu0 %v1802
    %1949 = vmatpush2.bf16.msra.mxu0 %v1801
    %1950 = vmatprep.subr.bf16.mxu0 %v1797
    %1951 = vmatpush2.bf16.msra.mxu0 %v1796
    %1952 = vmatprep.subr.bf16.mxu0 %v1792
    %1953 = vmatpush2.bf16.msra.mxu0 %v1791
    %1954 = vmatprep.subr.bf16.mxu0 %v1787
    %1955 = vmatpush2.bf16.msra.mxu0 %v1786
    %1956 = vmatprep.subr.bf16.mxu0 %v1782
    %1957 = vmatpush2.bf16.msra.mxu0 %v1781
    %1958 = vmatprep.subr.bf16.mxu0 %v1777
    %1959 = vmatpush2.bf16.msra.mxu0 %v1776
    %1960 = vmatprep.subr.bf16.mxu0 %v1772
    %1961 = vmatpush2.bf16.msra.mxu0 %v1771
    %1962 = vmatprep.mubr.bf16.mxu0 %v1349
    %1963 = vmatmul.mubr.bf16.gmra.mxu0 %v1348
    %v1964 = vpop.f32.mrf.mxu0
    %v1965 = vadd.f32 %v1459, %v1964
    %v1966 = vpop.f32.mrf.mxu0
    %v1967 = vadd.f32 %v1463, %v1966
    %v1968 = vpop.f32.mrf.mxu0
    %v1969 = vpop.f32.mrf.mxu0
    %1970 = vdwg.mxu0
    %1971 = vmatprep.subr.bf16.mxu0 0
    %1972 = vmatpush1.bf16.msra.mxu0 %v1768
    %1973 = vmatprep.subr.bf16.mxu0 0
    %1974 = vmatpush1.bf16.msra.mxu0 %v1763
    %1975 = vmatprep.subr.bf16.mxu0 0
    %1976 = vmatpush1.bf16.msra.mxu0 %v1758
    %1977 = vmatprep.subr.bf16.mxu0 0
    %1978 = vmatpush1.bf16.msra.mxu0 %v1753
    %1979 = vmatprep.subr.bf16.mxu0 0
    %1980 = vmatpush1.bf16.msra.mxu0 %v1748
    %1981 = vmatprep.subr.bf16.mxu0 0
    %1982 = vmatpush1.bf16.msra.mxu0 %v1743
    %1983 = vmatprep.subr.bf16.mxu0 0
    %1984 = vmatpush1.bf16.msra.mxu0 %v1738
    %1985 = vmatprep.subr.bf16.mxu0 0
    %1986 = vmatpush1.bf16.msra.mxu0 %v1733
    %1987 = vmatprep.subr.bf16.mxu0 0
    %1988 = vmatpush2.bf16.msra.mxu0 %v1808
    %1989 = vmatprep.subr.bf16.mxu0 0
    %1990 = vmatpush2.bf16.msra.mxu0 %v1803
    %1991 = vmatprep.subr.bf16.mxu0 0
    %1992 = vmatpush2.bf16.msra.mxu0 %v1798
    %1993 = vmatprep.subr.bf16.mxu0 0
    %1994 = vmatpush2.bf16.msra.mxu0 %v1793
    %1995 = vmatprep.subr.bf16.mxu0 0
    %1996 = vmatpush2.bf16.msra.mxu0 %v1788
    %1997 = vmatprep.subr.bf16.mxu0 0
    %1998 = vmatpush2.bf16.msra.mxu0 %v1783
    %1999 = vmatprep.subr.bf16.mxu0 0
    %2000 = vmatpush2.bf16.msra.mxu0 %v1778
    %2001 = vmatprep.subr.bf16.mxu0 0
    %2002 = vmatpush2.bf16.msra.mxu0 %v1773
    %2003 = vmatprep.mubr.bf16.mxu0 %v1349
    %2004 = vmatmul.mubr.bf16.gmra.mxu0 %v1348
    %v2005 = vpop.f32.mrf.mxu0
    %v2006 = vadd.f32 %v1467, %v2005
    %v2007 = vpop.f32.mrf.mxu0
    %v2008 = vpop.f32.mrf.mxu0
    %v2009 = vpop.f32.mrf.mxu0
    %2010 = vdwg.mxu0
    %2011 = vst [vmem:[#allocation17] sm:$0xff] %v1924
    %2012 = vst [vmem:[#allocation17 + $0x8] sm:$0xff] %v1926
    %2013 = vst [vmem:[#allocation17 + $0x10] sm:$0xff] %v1965
    %2014 = vst [vmem:[#allocation17 + $0x18] sm:$0xff] %v1967
    %2015 = vst [vmem:[#allocation17 + $0x20] sm:$0xff] %v2006
    // Predicated region
    $region86: #{tpu_custom_call.1} parent=1 // pred_check
      _
    $region87: #{tpu_custom_call.1} parent=1 // pred_check_branch
      %2017 = sbr.rel (0) target = $region89
    $region88: #{tpu_custom_call.1} parent=1 // pred_region
      %s2019 = ssub.s32 128, 128
      %2020 = vsyncadd [#allocation4], %s2019
      %s2022 = sshll.u32 [#allocation16], 4
      %s2023 = int_to_ptr.vmem [resolvable:$true] %s2022
      %2025 = dma.vmem_to_hbm [thread:$0]  %s2023, 128, %s13, [#allocation4]
    $region89: #{tpu_custom_call.1} parent=1 // pred_fallthru
      _
    // Predicated region
    $region90: #{tpu_custom_call.1} parent=1 // pred_check
      _
    $region91: #{tpu_custom_call.1} parent=1 // pred_check_branch
      %2027 = sbr.rel (0) target = $region93
    $region92: #{tpu_custom_call.1} parent=1 // pred_region
      %s2029 = ssub.s32 640, 640
      %2030 = vsyncadd [#allocation18], %s2029
      %s2032 = sshll.u32 [#allocation17], 4
      %s2033 = int_to_ptr.vmem [resolvable:$true] %s2032
      %2035 = dma.vmem_to_hbm [thread:$0]  %s2033, 640, %s14, [#allocation18]
    $region93: #{tpu_custom_call.1} parent=1 // pred_fallthru
      _
    // Predicated region
    $region94: #{tpu_custom_call.1} parent=1 // pred_check
      _
    $region95: #{tpu_custom_call.1} parent=1 // pred_check_branch
      %2037 = sbr.rel (0) target = $region97
    $region96: #{tpu_custom_call.1} parent=1 // pred_region
      %2038 = dma.done [#allocation4], 128
    $region97: #{tpu_custom_call.1} parent=1 // pred_fallthru
      _
    // Predicated region
    $region98: #{tpu_custom_call.1} parent=1 // pred_check
      _
    $region99: #{tpu_custom_call.1} parent=1 // pred_check_branch
      %2040 = sbr.rel (0) target = $region101
    $region100: #{tpu_custom_call.1} parent=1 // pred_region
      %2041 = dma.done [#allocation18], 640
    $region101: #{tpu_custom_call.1} parent=1 // pred_fallthru
      _
    %2042 = vsyncpa [#allocation3], 1
    %2043 = vsyncpa [#allocation6], 1
    %2044 = vsyncpa [#allocation9], 1
    %2045 = vsyncpa [#allocation12], 1
    %2046 = vsyncpa [#allocation15], 1
    %2047 = vsyncpa [#allocation4], 1
    %2048 = vsyncpa [#allocation18], 1

</llo_original>
